<compile_context>
chip_gen: v7x
topology: tpu7x:2x2x1
jax: 0.10.0
libtpu: 0.0.40
codegen_flags: <defaults>
</compile_context>

<pallas_src>
import functools

import jax
import jax.numpy as jnp
from jax.experimental import pallas as pl
from jax.experimental.pallas import tpu as pltpu


# ----------------------------------------------------------------------------
# Fused kernel: conv1(1x1)+BN+SiLU  ->  conv2(3x3, pad 1)+BN+SiLU (+ residual)
# ----------------------------------------------------------------------------
def _bottleneck_kernel(x_ref, w1_ref, b1_ref, w2_ref, b2_ref, o_ref, c_ref,
                       *, H, W, TH, use_add):
    """Grid = (batch, H // TH); the row-tile axis t is sequential ("arbitrary").

    x_ref : (1, H, W, Cin)       bf16  full image, resident across row tiles
    w1_ref: (Cin, Chid)          bf16  BN scale folded in
    b1_ref: (1, Chid)            f32
    w2_ref: (3, 3*Chid, Cout)    bf16  per-ky lane-concat of the 3 kx taps
    b2_ref: (1, Cout)            f32
    o_ref : (1, TH, W, Cout)
    c_ref : (H+2, W, 3*Chid)     bf16  scratch: kx-im2col of the hidden act,
                                       zero-padded by one row top & bottom
    """
    t = pl.program_id(1)
    Cin = x_ref.shape[-1]
    Chid = w1_ref.shape[1]
    Kc = c_ref.shape[-1]                                  # 3 * Chid
    Cout = o_ref.shape[-1]

    # ---- stage 1 (once per image): 1x1 conv + bias + SiLU, then build the
    # kx-im2col buffer ONCE, so stage 2 never slices the sublane (W) axis. ----
    @pl.when(t == 0)
    def _():
        # 2-D matmul on the MXU: (H*W, Cin) @ (Cin, Chid), bf16 in, f32 accum.
        x2 = x_ref[0].reshape(H * W, Cin)
        h = jnp.dot(x2, w1_ref[...], preferred_element_type=jnp.float32)
        h = h + b1_ref[0]
        h = h * jax.nn.sigmoid(h)                         # SiLU in f32
        h3 = h.reshape(H, W, Chid)

        # Column(kx)-shifted planes, built once per image (in f32, before the
        # single bf16 cast).  Channel (lane) concat -> K = 3*Chid for stage 2.
        zcol = jnp.zeros((H, 1, Chid), h3.dtype)
        left = jnp.concatenate([zcol, h3[:, :W - 1, :]], axis=1)   # h[y, x-1]
        right = jnp.concatenate([h3[:, 1:, :], zcol], axis=1)      # h[y, x+1]
        cat = jnp.concatenate([left, h3, right], axis=-1)          # (H, W, 3*Chid)

        # Zero ONLY the two border rows (they are never overwritten), then one
        # interior store whose offset is on the outer row axis (not the sublane
        # axis) -> unmasked full-width stores, no relayout.
        c_ref[0] = jnp.zeros((W, Kc), jnp.bfloat16)
        c_ref[H + 1] = jnp.zeros((W, Kc), jnp.bfloat16)
        c_ref[1:H + 1] = cat.astype(jnp.bfloat16)

    # ---- stage 2 (per row tile): 3x3 conv as 3 matmuls with K = 3*Chid,
    # accumulated into one f32 accumulator (MRB in-place accumulate on v7x). --
    r0 = t * TH

    def tap(ky):
        blk = c_ref[pl.ds(r0 + ky, TH)]                   # (TH, W, 3*Chid) bf16
        return jnp.dot(blk.reshape(TH * W, Kc), w2_ref[ky],
                       preferred_element_type=jnp.float32)

    y = tap(0)
    y = y + tap(1)
    y = y + tap(2)

    y = y + b2_ref[0]
    y = y * jax.nn.sigmoid(y)                             # SiLU in f32
    if use_add:
        # residual from the already-resident bf16 x block, upcast for the add
        res = x_ref[0, pl.ds(r0, TH), :, :].reshape(TH * W, Cin)
        y = y + res.astype(jnp.float32)
    o_ref[0] = y.reshape(TH, W, Cout).astype(o_ref.dtype)


# ----------------------------------------------------------------------------
# Tiling / VMEM heuristics (generation-aware)
# ----------------------------------------------------------------------------
def _tpu_vmem_capacity_bytes():
    try:
        return int(pltpu.get_tpu_info().vmem_capacity_bytes)
    except Exception:
        return 128 * 1024 * 1024                          # v5e/v6e default


def _divisors(n):
    return [d for d in range(1, n + 1) if n % d == 0]


def _snap_tile_h(H, tile_h):
    tile_h = max(1, min(H, int(tile_h)))
    return max(d for d in _divisors(H) if d <= tile_h)


def _pick_tile_h(H, W, Cin, Chid, Cout, budget_bytes):
    """Largest divisor of H whose per-step working set fits the budget, with a
    floor so tiles never degrade to a handful of rows (per-step overhead)."""
    # rough per-output-row working set: 3x bf16 (W,3*Chid) windows, f32 acc +
    # activation temp, double-buffered f32 output block, bf16 residual.
    per_row = W * (18 * Chid + 16 * Cout + 2 * Cin) + 1
    target = max(1, budget_bytes // per_row)
    divs = _divisors(H)
    th = max(d for d in divs if d <= target)
    floor_rows = min(H, max(8, -(-256 // W)))             # >=8 rows, >=256 px
    if th < floor_rows:
        bigger = [d for d in divs if d >= floor_rows]
        if bigger:
            th = min(bigger)
    return th


# ----------------------------------------------------------------------------
# Wrappers
# ----------------------------------------------------------------------------
def bottleneck_forward_nhwc(x_nhwc, params, shortcut=True, tile_h=None,
                            out_dtype=None):
    """NHWC fused Bottleneck.  Activations are consumed in bf16 (cast here if
    needed); output dtype defaults to the input dtype."""
    if out_dtype is None:
        out_dtype = x_nhwc.dtype
    if x_nhwc.dtype != jnp.bfloat16:
        x_nhwc = x_nhwc.astype(jnp.bfloat16)   # halves x DMA + resident VMEM

    N, H, W, Cin = x_nhwc.shape
    Chid = params["w1k"].shape[1]
    Cout = params["w2k"].shape[-1]
    use_add = bool(shortcut and Cin == Cout)

    # Generation-aware budgets: v7x has 64 MiB physical VMEM, v5e/v6e 128 MiB.
    vmem_cap = _tpu_vmem_capacity_bytes()
    small_vmem = vmem_cap <= (64 << 20)
    tile_budget = (4 << 20) if small_vmem else (8 << 20)
    vmem_limit = min(48 << 20, (vmem_cap * 5) // 8)       # 48 MiB / ~40 MiB v7x

    if tile_h is None:
        TH = _pick_tile_h(H, W, Cin, Chid, Cout, tile_budget)
    else:
        TH = _snap_tile_h(H, tile_h)
    T = H // TH

    kernel = functools.partial(_bottleneck_kernel, H=H, W=W, TH=TH,
                               use_add=use_add)
    return pl.pallas_call(
        kernel,
        out_shape=jax.ShapeDtypeStruct((N, H, W, Cout), out_dtype),
        grid_spec=pltpu.PrefetchScalarGridSpec(
            num_scalar_prefetch=0,
            grid=(N, T),
            in_specs=[
                # full image; index_map ignores t -> stays resident in VMEM
                pl.BlockSpec((1, H, W, Cin), lambda n, t: (n, 0, 0, 0)),
                pl.BlockSpec((Cin, Chid), lambda n, t: (0, 0)),
                pl.BlockSpec((1, Chid), lambda n, t: (0, 0)),
                pl.BlockSpec((3, 3 * Chid, Cout), lambda n, t: (0, 0, 0)),
                pl.BlockSpec((1, Cout), lambda n, t: (0, 0)),
            ],
            out_specs=pl.BlockSpec((1, TH, W, Cout), lambda n, t: (n, t, 0, 0)),
            scratch_shapes=[pltpu.VMEM((H + 2, W, 3 * Chid), jnp.bfloat16)],
        ),
        compiler_params=pltpu.CompilerParams(
            dimension_semantics=("parallel", "arbitrary"),
            vmem_limit_bytes=int(vmem_limit),
        ),
    )(x_nhwc, params["w1k"], params["b1"], params["w2k"], params["b2"])


def bottleneck_forward(x_nchw, params, shortcut=True, tile_h=None):
    # NCHW interface for parity with the PyTorch module.  In a full network
    # keep activations NHWC + bf16 end-to-end and hoist casts/transposes out.
    x = jnp.transpose(x_nchw, (0, 2, 3, 1))               # NCHW -> NHWC
    y = bottleneck_forward_nhwc(x, params, shortcut=shortcut, tile_h=tile_h,
                                out_dtype=x_nchw.dtype)
    return jnp.transpose(y, (0, 3, 1, 2))                 # NHWC -> NCHW


# ----------------------------------------------------------------------------
# Parameters: deterministic init, BN (eps=1e-3, matching BaseConv) folded into
# bf16 conv weights plus an f32 bias.  conv2 stored as (3, 3*Chid, Cout):
# per-ky concat of the 3 kx taps along the contraction axis.
# ----------------------------------------------------------------------------
def fold_bn(gamma, beta, mean, var, eps=1e-3):
    scale = gamma / jnp.sqrt(var + eps)
    bias = beta - mean * scale
    return scale, bias


def make_params(key, in_ch, out_ch, expansion=0.5):
    hid = int(out_ch * expansion)
    ks = jax.random.split(key, 10)
    # conv1: 1x1, stored (Cin, Chid)   (PyTorch (Chid, Cin, 1, 1) transposed)
    w1 = jax.random.normal(ks[0], (in_ch, hid), jnp.float32) * 0.1
    g1 = 1.0 + 0.1 * jax.random.normal(ks[1], (hid,), jnp.float32)
    be1 = 0.1 * jax.random.normal(ks[2], (hid,), jnp.float32)
    m1 = 0.1 * jax.random.normal(ks[3], (hid,), jnp.float32)
    v1 = 0.5 + jnp.abs(jax.random.normal(ks[4], (hid,), jnp.float32))
    # conv2: 3x3, stored HWIO (3, 3, Chid, Cout)
    w2 = jax.random.normal(ks[5], (3, 3, hid, out_ch), jnp.float32) * 0.1
    g2 = 1.0 + 0.1 * jax.random.normal(ks[6], (out_ch,), jnp.float32)
    be2 = 0.1 * jax.random.normal(ks[7], (out_ch,), jnp.float32)
    m2 = 0.1 * jax.random.normal(ks[8], (out_ch,), jnp.float32)
    v2 = 0.5 + jnp.abs(jax.random.normal(ks[9], (out_ch,), jnp.float32))

    s1, b1 = fold_bn(g1, be1, m1, v1)
    s2, b2 = fold_bn(g2, be2, m2, v2)
    w1k = (w1 * s1[None, :]).astype(jnp.bfloat16)                     # (Cin, Chid)
    w2k = (w2 * s2[None, None, None, :]).reshape(3, 3 * hid, out_ch)  # (3, 3*Chid, Cout)
    w2k = w2k.astype(jnp.bfloat16)
    return dict(w1k=w1k, b1=b1.reshape(1, hid),
                w2k=w2k, b2=b2.reshape(1, out_ch))


# ----------------------------------------------------------------------------
# Pure-JAX reference mirroring the kernel's numerics (bf16 activations / bf16
# matmuls with f32 accumulation, identical folded weights) for correctness.
# ----------------------------------------------------------------------------
def bottleneck_reference(x_nchw, params, shortcut=True):
    Chid = params["w1k"].shape[1]
    Cout = params["w2k"].shape[-1]
    x = jnp.transpose(x_nchw, (0, 2, 3, 1))               # NHWC
    xb = x.astype(jnp.bfloat16)                           # kernel consumes bf16
    use_add = bool(shortcut and x.shape[-1] == Cout)
    dn = ("NHWC", "HWIO", "NHWC")

    w1 = params["w1k"].reshape(1, 1, -1, Chid)
    h = jax.lax.conv_general_dilated(xb, w1, (1, 1), ((0, 0), (0, 0)),
                                     dimension_numbers=dn,
                                     preferred_element_type=jnp.float32)
    h = h + params["b1"][0]
    h = h * jax.nn.sigmoid(h)

    hb = h.astype(jnp.bfloat16)
    w2 = params["w2k"].reshape(3, 3, Chid, Cout)
    y = jax.lax.conv_general_dilated(hb, w2, (1, 1), ((1, 1), (1, 1)),
                                     dimension_numbers=dn,
                                     preferred_element_type=jnp.float32)
    y = y + params["b2"][0]
    y = y * jax.nn.sigmoid(y)
    if use_add:
        y = y + xb.astype(jnp.float32)
    return jnp.transpose(y, (0, 3, 1, 2)).astype(x_nchw.dtype)


if __name__ == "__main__":
    key = jax.random.PRNGKey(0)
    k_x, k_p1, k_p2 = jax.random.split(key, 3)

    N, C, H, W = 2, 4, 16, 16
    x = jax.random.normal(k_x, (N, C, H, W), jnp.float32)

    # Case 1: in_ch == out_ch -> residual shortcut active; explicit row tiling
    # (TH=8 -> 2 row tiles per image, 4 grid steps).
    p1 = make_params(k_p1, in_ch=C, out_ch=C, expansion=0.5)
    y1 = jax.block_until_ready(bottleneck_forward(x, p1, shortcut=True, tile_h=8))
    r1 = jax.block_until_ready(bottleneck_reference(x, p1, shortcut=True))
    assert y1.shape == (N, C, H, W)
    assert jnp.allclose(y1, r1, atol=2e-3, rtol=2e-3), "case1 mismatch vs reference"

    # Case 2: in_ch != out_ch -> no residual (and no residual read); default tiling.
    p2 = make_params(k_p2, in_ch=C, out_ch=2 * C, expansion=0.5)
    y2 = jax.block_until_ready(bottleneck_forward(x, p2, shortcut=True))
    r2 = jax.block_until_ready(bottleneck_reference(x, p2, shortcut=True))
    assert y2.shape == (N, 2 * C, H, W)
    assert jnp.allclose(y2, r2, atol=2e-3, rtol=2e-3), "case2 mismatch vs reference"

    print("KERNEL_OK")
</pallas_src>

<mosaic_0001>
module attributes {stable_mosaic.version = 11 : i64} {
  func.func @_bottleneck_kernel(%arg0: i32, %arg1: i32, %arg2: memref<1x16x16x4xbf16, #tpu.memory_space<vmem>>, %arg3: memref<4x2xbf16, #tpu.memory_space<vmem>>, %arg4: memref<1x2xf32, #tpu.memory_space<vmem>>, %arg5: memref<3x6x4xbf16, #tpu.memory_space<vmem>>, %arg6: memref<1x4xf32, #tpu.memory_space<vmem>>, %arg7: memref<1x8x16x4xf32, #tpu.memory_space<vmem>>, %arg8: memref<18x16x6xbf16, #tpu.memory_space<vmem>>) attributes {dimension_semantics = [#tpu.dimension_semantics<parallel>, #tpu.dimension_semantics<arbitrary>], iteration_bounds = array<i64: 2, 2>, scalar_prefetch = 0 : i64, scratch_operands = 1 : i64, tpu.core_type = #tpu.core_type<tc>, window_params = [{transform_indices = @transform_0, window_bounds = array<i64: 1, 16, 16, 4>}, {pipeline_mode = #tpu.pipeline_mode<synchronous>, transform_indices = @transform_1, window_bounds = array<i64: 4, 2>}, {pipeline_mode = #tpu.pipeline_mode<synchronous>, transform_indices = @transform_2, window_bounds = array<i64: 1, 2>}, {pipeline_mode = #tpu.pipeline_mode<synchronous>, transform_indices = @transform_3, window_bounds = array<i64: 3, 6, 4>}, {pipeline_mode = #tpu.pipeline_mode<synchronous>, transform_indices = @transform_4, window_bounds = array<i64: 1, 4>}, {transform_indices = @transform_5, window_bounds = array<i64: 1, 8, 16, 4>}]} {
    %c0_i32 = arith.constant 0 : i32
    %0 = arith.cmpi eq, %arg1, %c0_i32 : i32
    %1 = arith.extui %0 : i1 to i32
    %c0_i32_0 = arith.constant 0 : i32
    %2 = arith.cmpi ne, %1, %c0_i32_0 : i32
    scf.if %2 {
      %c0_26 = arith.constant 0 : index
      %c0_27 = arith.constant 0 : index
      %c0_28 = arith.constant 0 : index
      %c0_29 = arith.constant 0 : index
      %48 = vector.load %arg2[%c0_26, %c0_27, %c0_28, %c0_29] : memref<1x16x16x4xbf16, #tpu.memory_space<vmem>>, vector<1x16x16x4xbf16>
      %49 = vector.shape_cast %48 : vector<1x16x16x4xbf16> to vector<16x16x4xbf16>
      %50 = vector.shape_cast %49 : vector<16x16x4xbf16> to vector<256x4xbf16>
      %c0_30 = arith.constant 0 : index
      %c0_31 = arith.constant 0 : index
      %51 = vector.load %arg3[%c0_30, %c0_31] : memref<4x2xbf16, #tpu.memory_space<vmem>>, vector<4x2xbf16>
      %cst_32 = arith.constant dense<0.000000e+00> : vector<256x2xf32>
      %52 = tpu.matmul %50, %51, %cst_32 {dimension_numbers = #tpu.dot_dimension_numbers<[1], [0], [0], [1], [0, 0, 1, 1], [], []>} : vector<256x4xbf16>, vector<4x2xbf16>, vector<256x2xf32> -> vector<256x2xf32>
      %c0_33 = arith.constant 0 : index
      %c0_34 = arith.constant 0 : index
      %53 = vector.load %arg4[%c0_33, %c0_34] : memref<1x2xf32, #tpu.memory_space<vmem>>, vector<1x2xf32>
      %54 = vector.shape_cast %53 : vector<1x2xf32> to vector<2xf32>
      %55 = vector.shape_cast %54 : vector<2xf32> to vector<1x2xf32>
      %56 = vector.broadcast %55 : vector<1x2xf32> to vector<256x2xf32>
      %57 = arith.addf %52, %56 : vector<256x2xf32>
      %58 = arith.negf %57 : vector<256x2xf32>
      %59 = math.exp %58 : vector<256x2xf32>
      %cst_35 = arith.constant 1.000000e+00 : f32
      %60 = vector.broadcast %cst_35 : f32 to vector<256x2xf32>
      %61 = arith.addf %60, %59 : vector<256x2xf32>
      %62 = arith.divf %60, %61 : vector<256x2xf32>
      %63 = arith.mulf %57, %62 : vector<256x2xf32>
      %64 = vector.shape_cast %63 : vector<256x2xf32> to vector<16x16x2xf32>
      %cst_36 = arith.constant 0.000000e+00 : f32
      %65 = vector.broadcast %cst_36 : f32 to vector<16x1x2xf32>
      %66 = vector.extract_strided_slice %64 {offsets = [0, 0, 0], sizes = [16, 15, 2], strides = [1, 1, 1]} : vector<16x16x2xf32> to vector<16x15x2xf32>
      %67 = tpu.concatenate %65, %66 in 1 : vector<16x1x2xf32>, vector<16x15x2xf32> -> vector<16x16x2xf32>
      %68 = vector.extract_strided_slice %64 {offsets = [0, 1, 0], sizes = [16, 15, 2], strides = [1, 1, 1]} : vector<16x16x2xf32> to vector<16x15x2xf32>
      %69 = tpu.concatenate %68, %65 in 1 : vector<16x15x2xf32>, vector<16x1x2xf32> -> vector<16x16x2xf32>
      %70 = tpu.concatenate %67, %64, %69 in 2 : vector<16x16x2xf32>, vector<16x16x2xf32>, vector<16x16x2xf32> -> vector<16x16x6xf32>
      %cst_37 = arith.constant 0.000000e+00 : bf16
      %71 = vector.broadcast %cst_37 : bf16 to vector<16x6xbf16>
      %c0_38 = arith.constant 0 : index
      %c0_39 = arith.constant 0 : index
      %c0_40 = arith.constant 0 : index
      %72 = vector.load %arg8[%c0_38, %c0_39, %c0_40] : memref<18x16x6xbf16, #tpu.memory_space<vmem>>, vector<1x16x6xbf16>
      %73 = vector.shape_cast %72 : vector<1x16x6xbf16> to vector<16x6xbf16>
      %74 = vector.shape_cast %71 : vector<16x6xbf16> to vector<1x16x6xbf16>
      tpu.vector_store %arg8[%c0_38, %c0_39, %c0_40], %74 {strides = array<i32>} : memref<18x16x6xbf16, #tpu.memory_space<vmem>>, vector<1x16x6xbf16>,
      %cst_41 = arith.constant 0.000000e+00 : bf16
      %75 = vector.broadcast %cst_41 : bf16 to vector<16x6xbf16>
      %c17 = arith.constant 17 : index
      %c0_42 = arith.constant 0 : index
      %c0_43 = arith.constant 0 : index
      %76 = vector.load %arg8[%c17, %c0_42, %c0_43] : memref<18x16x6xbf16, #tpu.memory_space<vmem>>, vector<1x16x6xbf16>
      %77 = vector.shape_cast %76 : vector<1x16x6xbf16> to vector<16x6xbf16>
      %78 = vector.shape_cast %75 : vector<16x6xbf16> to vector<1x16x6xbf16>
      tpu.vector_store %arg8[%c17, %c0_42, %c0_43], %78 {strides = array<i32>} : memref<18x16x6xbf16, #tpu.memory_space<vmem>>, vector<1x16x6xbf16>,
      %79 = arith.truncf %70 : vector<16x16x6xf32> to vector<16x16x6xbf16>
      %c1_44 = arith.constant 1 : index
      %c0_45 = arith.constant 0 : index
      %c0_46 = arith.constant 0 : index
      %80 = vector.load %arg8[%c1_44, %c0_45, %c0_46] : memref<18x16x6xbf16, #tpu.memory_space<vmem>>, vector<16x16x6xbf16>
      tpu.vector_store %arg8[%c1_44, %c0_45, %c0_46], %79 {strides = array<i32>} : memref<18x16x6xbf16, #tpu.memory_space<vmem>>, vector<16x16x6xbf16>,
    } else {
    }
    %c8_i32 = arith.constant 8 : i32
    %3 = arith.muli %arg1, %c8_i32 : i32
    %c0_i32_1 = arith.constant 0 : i32
    %4 = arith.addi %3, %c0_i32_1 : i32
    %5 = arith.index_cast %4 : i32 to index
    %c0 = arith.constant 0 : index
    %c0_2 = arith.constant 0 : index
    %6 = vector.load %arg8[%5, %c0, %c0_2] : memref<18x16x6xbf16, #tpu.memory_space<vmem>>, vector<8x16x6xbf16>
    %7 = vector.shape_cast %6 : vector<8x16x6xbf16> to vector<128x6xbf16>
    %c0_3 = arith.constant 0 : index
    %c0_4 = arith.constant 0 : index
    %c0_5 = arith.constant 0 : index
    %8 = vector.load %arg5[%c0_3, %c0_4, %c0_5] : memref<3x6x4xbf16, #tpu.memory_space<vmem>>, vector<1x6x4xbf16>
    %9 = vector.shape_cast %8 : vector<1x6x4xbf16> to vector<6x4xbf16>
    %cst = arith.constant dense<0.000000e+00> : vector<128x4xf32>
    %10 = tpu.matmul %7, %9, %cst {dimension_numbers = #tpu.dot_dimension_numbers<[1], [0], [0], [1], [0, 0, 1, 1], [], []>} : vector<128x6xbf16>, vector<6x4xbf16>, vector<128x4xf32> -> vector<128x4xf32>
    %c1_i32 = arith.constant 1 : i32
    %11 = arith.addi %3, %c1_i32 : i32
    %12 = arith.index_cast %11 : i32 to index
    %c0_6 = arith.constant 0 : index
    %c0_7 = arith.constant 0 : index
    %13 = vector.load %arg8[%12, %c0_6, %c0_7] : memref<18x16x6xbf16, #tpu.memory_space<vmem>>, vector<8x16x6xbf16>
    %14 = vector.shape_cast %13 : vector<8x16x6xbf16> to vector<128x6xbf16>
    %c1 = arith.constant 1 : index
    %c0_8 = arith.constant 0 : index
    %c0_9 = arith.constant 0 : index
    %15 = vector.load %arg5[%c1, %c0_8, %c0_9] : memref<3x6x4xbf16, #tpu.memory_space<vmem>>, vector<1x6x4xbf16>
    %16 = vector.shape_cast %15 : vector<1x6x4xbf16> to vector<6x4xbf16>
    %cst_10 = arith.constant dense<0.000000e+00> : vector<128x4xf32>
    %17 = tpu.matmul %14, %16, %cst_10 {dimension_numbers = #tpu.dot_dimension_numbers<[1], [0], [0], [1], [0, 0, 1, 1], [], []>} : vector<128x6xbf16>, vector<6x4xbf16>, vector<128x4xf32> -> vector<128x4xf32>
    %18 = arith.addf %10, %17 : vector<128x4xf32>
    %c2_i32 = arith.constant 2 : i32
    %19 = arith.addi %3, %c2_i32 : i32
    %20 = arith.index_cast %19 : i32 to index
    %c0_11 = arith.constant 0 : index
    %c0_12 = arith.constant 0 : index
    %21 = vector.load %arg8[%20, %c0_11, %c0_12] : memref<18x16x6xbf16, #tpu.memory_space<vmem>>, vector<8x16x6xbf16>
    %22 = vector.shape_cast %21 : vector<8x16x6xbf16> to vector<128x6xbf16>
    %c2 = arith.constant 2 : index
    %c0_13 = arith.constant 0 : index
    %c0_14 = arith.constant 0 : index
    %23 = vector.load %arg5[%c2, %c0_13, %c0_14] : memref<3x6x4xbf16, #tpu.memory_space<vmem>>, vector<1x6x4xbf16>
    %24 = vector.shape_cast %23 : vector<1x6x4xbf16> to vector<6x4xbf16>
    %cst_15 = arith.constant dense<0.000000e+00> : vector<128x4xf32>
    %25 = tpu.matmul %22, %24, %cst_15 {dimension_numbers = #tpu.dot_dimension_numbers<[1], [0], [0], [1], [0, 0, 1, 1], [], []>} : vector<128x6xbf16>, vector<6x4xbf16>, vector<128x4xf32> -> vector<128x4xf32>
    %26 = arith.addf %18, %25 : vector<128x4xf32>
    %c0_16 = arith.constant 0 : index
    %c0_17 = arith.constant 0 : index
    %27 = vector.load %arg6[%c0_16, %c0_17] : memref<1x4xf32, #tpu.memory_space<vmem>>, vector<1x4xf32>
    %28 = vector.shape_cast %27 : vector<1x4xf32> to vector<4xf32>
    %29 = vector.shape_cast %28 : vector<4xf32> to vector<1x4xf32>
    %30 = vector.broadcast %29 : vector<1x4xf32> to vector<128x4xf32>
    %31 = arith.addf %26, %30 : vector<128x4xf32>
    %32 = arith.negf %31 : vector<128x4xf32>
    %33 = math.exp %32 : vector<128x4xf32>
    %cst_18 = arith.constant 1.000000e+00 : f32
    %34 = vector.broadcast %cst_18 : f32 to vector<128x4xf32>
    %35 = arith.addf %34, %33 : vector<128x4xf32>
    %36 = arith.divf %34, %35 : vector<128x4xf32>
    %37 = arith.mulf %31, %36 : vector<128x4xf32>
    %c0_19 = arith.constant 0 : index
    %38 = arith.index_cast %3 : i32 to index
    %c0_20 = arith.constant 0 : index
    %c0_21 = arith.constant 0 : index
    %39 = vector.load %arg2[%c0_19, %38, %c0_20, %c0_21] : memref<1x16x16x4xbf16, #tpu.memory_space<vmem>>, vector<1x8x16x4xbf16>
    %40 = vector.shape_cast %39 : vector<1x8x16x4xbf16> to vector<8x16x4xbf16>
    %41 = vector.shape_cast %40 : vector<8x16x4xbf16> to vector<128x4xbf16>
    %42 = arith.extf %41 : vector<128x4xbf16> to vector<128x4xf32>
    %43 = arith.addf %37, %42 : vector<128x4xf32>
    %44 = vector.shape_cast %43 : vector<128x4xf32> to vector<8x16x4xf32>
    %c0_22 = arith.constant 0 : index
    %c0_23 = arith.constant 0 : index
    %c0_24 = arith.constant 0 : index
    %c0_25 = arith.constant 0 : index
    %45 = vector.load %arg7[%c0_22, %c0_23, %c0_24, %c0_25] : memref<1x8x16x4xf32, #tpu.memory_space<vmem>>, vector<1x8x16x4xf32>
    %46 = vector.shape_cast %45 : vector<1x8x16x4xf32> to vector<8x16x4xf32>
    %47 = vector.shape_cast %44 : vector<8x16x4xf32> to vector<1x8x16x4xf32>
    tpu.vector_store %arg7[%c0_22, %c0_23, %c0_24, %c0_25], %47 {strides = array<i32>} : memref<1x8x16x4xf32, #tpu.memory_space<vmem>>, vector<1x8x16x4xf32>,
    return
  }
  func.func @transform_0(%arg0: i32, %arg1: i32) -> (i32, i32, i32, i32) {
    %c0_i32 = arith.constant 0 : i32
    %c0_i32_0 = arith.constant 0 : i32
    %c0_i32_1 = arith.constant 0 : i32
    %c0_i32_2 = arith.constant 0 : i32
    return %arg0, %c0_i32, %c0_i32_0, %c0_i32_1 : i32, i32, i32, i32
  }
  func.func @transform_1(%arg0: i32, %arg1: i32) -> (i32, i32) {
    %c0_i32 = arith.constant 0 : i32
    %c0_i32_0 = arith.constant 0 : i32
    %c0_i32_1 = arith.constant 0 : i32
    return %c0_i32, %c0_i32_0 : i32, i32
  }
  func.func @transform_2(%arg0: i32, %arg1: i32) -> (i32, i32) {
    %c0_i32 = arith.constant 0 : i32
    %c0_i32_0 = arith.constant 0 : i32
    %c0_i32_1 = arith.constant 0 : i32
    return %c0_i32, %c0_i32_0 : i32, i32
  }
  func.func @transform_3(%arg0: i32, %arg1: i32) -> (i32, i32, i32) {
    %c0_i32 = arith.constant 0 : i32
    %c0_i32_0 = arith.constant 0 : i32
    %c0_i32_1 = arith.constant 0 : i32
    %c0_i32_2 = arith.constant 0 : i32
    return %c0_i32, %c0_i32_0, %c0_i32_1 : i32, i32, i32
  }
  func.func @transform_4(%arg0: i32, %arg1: i32) -> (i32, i32) {
    %c0_i32 = arith.constant 0 : i32
    %c0_i32_0 = arith.constant 0 : i32
    %c0_i32_1 = arith.constant 0 : i32
    return %c0_i32, %c0_i32_0 : i32, i32
  }
  func.func @transform_5(%arg0: i32, %arg1: i32) -> (i32, i32, i32, i32) {
    %c0_i32 = arith.constant 0 : i32
    %c0_i32_0 = arith.constant 0 : i32
    %c0_i32_1 = arith.constant 0 : i32
    return %arg0, %arg1, %c0_i32, %c0_i32_0 : i32, i32, i32, i32
  }
}

</mosaic_0001>

<llo_original>
// kernel: tpu_custom_call.1
$region0: #{tpu_custom_call.1}
  #allocation0 [shape = 'u32[]', space=smem, size = 0x4, offset = 0x4, fixed_abs, tag = 'smem constant byte address 0x4 - core index']
  #allocation1 [shape = 'u32[144,128]{1,0:T(1,128)}', space=vmem, size = 0x12000, scoped, tag = 'internal scratch']
  #allocation2 [shape = 'bf16[18,16,6]{2,1,0:T(16,128)(2,1)}', space=vmem, size = 0x12000, scoped, tag = 'scratch operand']
  %s0 = inlined_call_operand.vmem [shape: bf16[2,16,16,4], index: 0, kind: input, shape index: {}]
  %s1 = inlined_call_operand.vmem [shape: bf16[4,2], index: 1, kind: input, shape index: {}]
  %s2 = inlined_call_operand.vmem [shape: f32[1,2], index: 2, kind: input, shape index: {}]
  %s3 = inlined_call_operand.vmem [shape: bf16[3,6,4], index: 3, kind: input, shape index: {}]
  %s4 = inlined_call_operand.vmem [shape: f32[1,4], index: 4, kind: input, shape index: {}]
  %s5 = inlined_call_operand.vmem [shape: f32[2,16,16,4], index: 5, kind: output, shape index: {}]
  %s6 = sld [smem:[#allocation0]]
  $region57: #{tpu_custom_call.1} parent=0
    _
  %s8 = ssub.s32 1, %s6
  %s9 = scalar_select 0, %s8, %s6
  loop: start=0, step=1, limit=6
  $region2: #{tpu_custom_call.1} parent=0 // loop_pre_header
    _
  $region3: #{tpu_custom_call.1} parent=0 // loop_header
    %s11 = sphi 0, %s15
    %p12 = scmp.ge.s32.totalorder %s11, 6
    %s18 = sphi 0, %s30
    %s19 = sphi 0, %s26
    %s20 = sphi 0, %s18
    %s21 = sphi 0, %s19
    %s22 = sphi 0, %s20
    %s23 = sphi 0, %s21
    %s33 = sphi 0, %s35
    %s36 = sphi 0, %s33
    %s37 = sphi 0, %s36
    %s53 = sphi 0, %s37
    %s57 = sphi 0, %s57
    %s59 = sphi 0, %s57
    %s60 = sphi 0, %s59
    %s74 = sphi 0, %s60
    %s78 = sphi 0, %s78
    %s80 = sphi 0, %s78
    %s81 = sphi 0, %s80
    %s95 = sphi 0, %s81
    %s99 = sphi 0, %s99
    %s101 = sphi 0, %s99
    %s102 = sphi 0, %s101
    %s116 = sphi 0, %s102
    %s120 = sphi 0, %s120
    %s122 = sphi 0, %s120
    %s123 = sphi 0, %s122
    %s137 = sphi 0, %s123
    %s145 = sphi 0, %s147
    %s148 = sphi 0, %s145
    %s149 = sphi 0, %s148
    %s165 = sphi 0, %s149
  $region4: #{tpu_custom_call.1} parent=0 // loop_header_branch
    %14 = sbr.rel (%p12) target = $region8
  $region5: #{tpu_custom_call.1} parent=0 // loop_body
    %s16 = ssub.s32 %s11, 1
    %s17 = ssub.s32 %s11, 2
    %s24 = sadd.s32 1, %s19
    %p25 = scmp.ge.s32.totalorder %s24, 2
    %s26 = scalar_select %p25, 0, %s24
    %s27 = sadd.s32 1, %s18
    %s28 = scalar_select %p25, %s27, %s18
    %p29 = scmp.ge.s32.totalorder %s28, 2
    %s30 = scalar_select %p29, 0, %s28
    %s31 = ssub.s32 %s18, %s30
    %p32 = scmp.eq.s32.totalorder %s31, 0
    %s34 = sadd.s32 %s33, 1
    %s35 = scalar_select %p32, %s33, %s34
    %p38 = pneg %p32
    %p39 = scmp.eq.s32.totalorder %s11, 3
    %p40 = por %p38, %p39
    %p41 = scmp.ne.s32.totalorder %s33, %s36
    %p42 = scmp.eq.s32.totalorder %s11, 0
    %p43 = por %p41, %p42
    %p44 = scmp.ne.s32.totalorder %s33, %s36
    %p45 = scmp.eq.s32.totalorder %s16, 3
    %p46 = por %p44, %p45
    %p47 = scmp.ne.s32.totalorder %s36, %s37
    %p48 = scmp.eq.s32.totalorder %s16, 0
    %p49 = por %p47, %p48
    %p50 = scmp.ne.s32.totalorder %s36, %s37
    %p51 = scmp.eq.s32.totalorder %s17, 3
    %p52 = por %p50, %p51
    %p54 = scmp.ne.s32.totalorder %s37, %s53
    %p55 = scmp.eq.s32.totalorder %s17, 0
    %p56 = por %p54, %p55
    %s58 = sadd.s32 %s57, 1
    %p61 = scmp.eq.s32.totalorder %s11, 3
    %p62 = scmp.ne.s32.totalorder %s57, %s59
    %p63 = scmp.eq.s32.totalorder %s11, 0
    %p64 = por %p62, %p63
    %p65 = scmp.ne.s32.totalorder %s57, %s59
    %p66 = scmp.eq.s32.totalorder %s16, 3
    %p67 = por %p65, %p66
    %p68 = scmp.ne.s32.totalorder %s59, %s60
    %p69 = scmp.eq.s32.totalorder %s16, 0
    %p70 = por %p68, %p69
    %p71 = scmp.ne.s32.totalorder %s59, %s60
    %p72 = scmp.eq.s32.totalorder %s17, 3
    %p73 = por %p71, %p72
    %p75 = scmp.ne.s32.totalorder %s60, %s74
    %p76 = scmp.eq.s32.totalorder %s17, 0
    %p77 = por %p75, %p76
    %s79 = sadd.s32 %s78, 1
    %p82 = scmp.eq.s32.totalorder %s11, 3
    %p83 = scmp.ne.s32.totalorder %s78, %s80
    %p84 = scmp.eq.s32.totalorder %s11, 0
    %p85 = por %p83, %p84
    %p86 = scmp.ne.s32.totalorder %s78, %s80
    %p87 = scmp.eq.s32.totalorder %s16, 3
    %p88 = por %p86, %p87
    %p89 = scmp.ne.s32.totalorder %s80, %s81
    %p90 = scmp.eq.s32.totalorder %s16, 0
    %p91 = por %p89, %p90
    %p92 = scmp.ne.s32.totalorder %s80, %s81
    %p93 = scmp.eq.s32.totalorder %s17, 3
    %p94 = por %p92, %p93
    %p96 = scmp.ne.s32.totalorder %s81, %s95
    %p97 = scmp.eq.s32.totalorder %s17, 0
    %p98 = por %p96, %p97
    %s100 = sadd.s32 %s99, 1
    %p103 = scmp.eq.s32.totalorder %s11, 3
    %p104 = scmp.ne.s32.totalorder %s99, %s101
    %p105 = scmp.eq.s32.totalorder %s11, 0
    %p106 = por %p104, %p105
    %p107 = scmp.ne.s32.totalorder %s99, %s101
    %p108 = scmp.eq.s32.totalorder %s16, 3
    %p109 = por %p107, %p108
    %p110 = scmp.ne.s32.totalorder %s101, %s102
    %p111 = scmp.eq.s32.totalorder %s16, 0
    %p112 = por %p110, %p111
    %p113 = scmp.ne.s32.totalorder %s101, %s102
    %p114 = scmp.eq.s32.totalorder %s17, 3
    %p115 = por %p113, %p114
    %p117 = scmp.ne.s32.totalorder %s102, %s116
    %p118 = scmp.eq.s32.totalorder %s17, 0
    %p119 = por %p117, %p118
    %s121 = sadd.s32 %s120, 1
    %p124 = scmp.eq.s32.totalorder %s11, 3
    %p125 = scmp.ne.s32.totalorder %s120, %s122
    %p126 = scmp.eq.s32.totalorder %s11, 0
    %p127 = por %p125, %p126
    %p128 = scmp.ne.s32.totalorder %s120, %s122
    %p129 = scmp.eq.s32.totalorder %s16, 3
    %p130 = por %p128, %p129
    %p131 = scmp.ne.s32.totalorder %s122, %s123
    %p132 = scmp.eq.s32.totalorder %s16, 0
    %p133 = por %p131, %p132
    %p134 = scmp.ne.s32.totalorder %s122, %s123
    %p135 = scmp.eq.s32.totalorder %s17, 3
    %p136 = por %p134, %p135
    %p138 = scmp.ne.s32.totalorder %s123, %s137
    %p139 = scmp.eq.s32.totalorder %s17, 0
    %p140 = por %p138, %p139
    %s141 = ssub.s32 %s18, %s30
    %s142 = ssub.s32 %s19, %s26
    %s143 = sor.u32 %s141, %s142
    %p144 = scmp.eq.s32.totalorder %s143, 0
    %s146 = sadd.s32 %s145, 1
    %s147 = scalar_select %p144, %s145, %s146
    %p150 = pneg %p144
    %p151 = scmp.eq.s32.totalorder %s11, 3
    %p152 = por %p150, %p151
    %p153 = scmp.ne.s32.totalorder %s145, %s148
    %p154 = scmp.eq.s32.totalorder %s11, 0
    %p155 = por %p153, %p154
    %p156 = scmp.ne.s32.totalorder %s145, %s148
    %p157 = scmp.eq.s32.totalorder %s16, 3
    %p158 = por %p156, %p157
    %p159 = scmp.ne.s32.totalorder %s148, %s149
    %p160 = scmp.eq.s32.totalorder %s16, 0
    %p161 = por %p159, %p160
    %p162 = scmp.ne.s32.totalorder %s148, %s149
    %p163 = scmp.eq.s32.totalorder %s17, 3
    %p164 = por %p162, %p163
    %p166 = scmp.ne.s32.totalorder %s149, %s165
    %p167 = scmp.eq.s32.totalorder %s17, 0
    %p168 = por %p166, %p167
    %p169 = scmp.le.s32.totalorder 1, %s11
    %p170 = scmp.lt.s32.totalorder %s11, 5
    %p171 = pnand %p169, %p170
    %p172 = pneg %p171
    // Predicated region
    $region9: #{tpu_custom_call.1} parent=5 // pred_check
      _
    $region10: #{tpu_custom_call.1} parent=5 // pred_check_branch
      %174 = sbr.rel (%p171) target = $region12
    $region11: #{tpu_custom_call.1} parent=5 // pred_region
      %s175 = ssub.s32 %s11, 1
      // Predicated region
      $region13: #{tpu_custom_call.1} parent=11 // pred_check
        %p176 = pneg %p70
      $region14: #{tpu_custom_call.1} parent=11 // pred_check_branch
        %178 = sbr.rel (%p176) target = $region16
      $region15: #{tpu_custom_call.1} parent=11 // pred_region
        _
      $region16: #{tpu_custom_call.1} parent=11 // pred_fallthru
        _
      // Predicated region
      $region17: #{tpu_custom_call.1} parent=11 // pred_check
        %p179 = pneg %p91
      $region18: #{tpu_custom_call.1} parent=11 // pred_check_branch
        %181 = sbr.rel (%p179) target = $region20
      $region19: #{tpu_custom_call.1} parent=11 // pred_region
        _
      $region20: #{tpu_custom_call.1} parent=11 // pred_fallthru
        _
      // Predicated region
      $region21: #{tpu_custom_call.1} parent=11 // pred_check
        %p182 = pneg %p112
      $region22: #{tpu_custom_call.1} parent=11 // pred_check_branch
        %184 = sbr.rel (%p182) target = $region24
      $region23: #{tpu_custom_call.1} parent=11 // pred_region
        _
      $region24: #{tpu_custom_call.1} parent=11 // pred_fallthru
        _
      // Predicated region
      $region25: #{tpu_custom_call.1} parent=11 // pred_check
        %p185 = pneg %p133
      $region26: #{tpu_custom_call.1} parent=11 // pred_check_branch
        %187 = sbr.rel (%p185) target = $region28
      $region27: #{tpu_custom_call.1} parent=11 // pred_region
        _
      $region28: #{tpu_custom_call.1} parent=11 // pred_fallthru
        _
    $region12: #{tpu_custom_call.1} parent=5 // pred_fallthru
      _
    %p188 = scmp.lt.s32.totalorder %s11, 4
    // Predicated region
    $region29: #{tpu_custom_call.1} parent=5 // pred_check
      %p189 = pneg %p188
    $region30: #{tpu_custom_call.1} parent=5 // pred_check_branch
      %191 = sbr.rel (%p189) target = $region32
    $region31: #{tpu_custom_call.1} parent=5 // pred_region
      // Predicated region
      $region33: #{tpu_custom_call.1} parent=31 // pred_check
        %p192 = pneg %p43
      $region34: #{tpu_custom_call.1} parent=31 // pred_check_branch
        %194 = sbr.rel (%p192) target = $region36
      $region35: #{tpu_custom_call.1} parent=31 // pred_region
        %p195 = scmp.lt.s32.totalorder %s18, 1
        %s196 = scalar_select %p195, %s18, 1
        %s197 = smul.addr %s196, 32
        %s198 = smul.addr %s197, 4
        %s199 = scalar_lea.vmem %s0, %s198
      $region36: #{tpu_custom_call.1} parent=31 // pred_fallthru
        _
    $region32: #{tpu_custom_call.1} parent=5 // pred_fallthru
      _
    %p200 = scmp.le.s32.totalorder 1, %s11
    %p201 = scmp.lt.s32.totalorder %s11, 5
    %p202 = pnand %p200, %p201
    %p203 = pneg %p202
    // Predicated region
    $region37: #{tpu_custom_call.1} parent=5 // pred_check
      _
    $region38: #{tpu_custom_call.1} parent=5 // pred_check_branch
      %205 = sbr.rel (%p202) target = $region40
    $region39: #{tpu_custom_call.1} parent=5 // pred_region
      %s206 = ssub.s32 %s11, 1
      %p207 = scmp.lt.s32.totalorder %s20, 1
      %s208 = scalar_select %p207, %s20, 1
      %s209 = smul.addr %s208, 32
      %s210 = smul.addr %s209, 4
      %s211 = scalar_lea.vmem %s0, %s210
      %p212 = pneg %p49
      %p213 = pneg %p46
      %p214 = pneg %p70
      %p215 = pneg %p67
      %p216 = pneg %p91
      %p217 = pneg %p88
      %p218 = pneg %p112
      %p219 = pneg %p109
      %p220 = pneg %p133
      %p221 = pneg %p130
      %p222 = pneg %p161
      %p223 = pneg %p158
      %s224 = smul.u32 8, %s21
      %p225 = scmp.lt.s32.totalorder %s20, 1
      %s226 = scalar_select %p225, %s20, 1
      %p227 = scmp.lt.s32.totalorder %s224, 15
      %s228 = scalar_select %p227, %s224, 15
      %s229 = smul.addr %s228, 2
      %s230 = smul.addr %s226, 32
      %s231 = sadd.s32 %s229, %s230
      %s232 = smul.addr %s231, 8
      %s233 = scalar_lea.vmem %s5, %s232
      %p234 = scmp.lt.s32.totalorder %s20, 1
      %s235 = scalar_select %p234, %s20, 1
      %s236 = smul.addr %s235, 32
      %s237 = smul.addr %s236, 4
      %s238 = scalar_lea.vmem %s0, %s237
      %s239 = smul.u32 8, %s21
      %p240 = scmp.lt.s32.totalorder %s20, 1
      %s241 = scalar_select %p240, %s20, 1
      %p242 = scmp.lt.s32.totalorder %s239, 15
      %s243 = scalar_select %p242, %s239, 15
      %s244 = smul.addr %s243, 2
      %s245 = smul.addr %s241, 32
      %s246 = sadd.s32 %s244, %s245
      %s247 = smul.addr %s246, 8
      %s248 = scalar_lea.vmem %s5, %s247
      %s249 = smul.u32 8, %s21
      %p251 = scmp.eq.s32.totalorder %s21, 0
      // Predicated region
      $region41: #{tpu_custom_call.1} parent=39 // pred_check
        %p252 = pneg %p251
      $region42: #{tpu_custom_call.1} parent=39 // pred_check_branch
        %254 = sbr.rel (%p252) target = $region44
      $region43: #{tpu_custom_call.1} parent=39 // pred_region
        %v255 = vld [vmem:[%s238] sm:$0xf]
        %v256 = vld [vmem:[%s238 + $0x4] sm:$0xf]
        %v257 = vld [vmem:[%s238 + $0x8] sm:$0xf]
        %v258 = vld [vmem:[%s238 + $0xc] sm:$0xf]
        %v259 = vld [vmem:[%s238 + $0x10] sm:$0xf]
        %v260 = vld [vmem:[%s238 + $0x14] sm:$0xf]
        %v261 = vld [vmem:[%s238 + $0x18] sm:$0xf]
        %v262 = vld [vmem:[%s238 + $0x1c] sm:$0xf]
        %v263 = vld [vmem:[%s238 + $0x20] sm:$0xf]
        %v264 = vld [vmem:[%s238 + $0x24] sm:$0xf]
        %v265 = vld [vmem:[%s238 + $0x28] sm:$0xf]
        %v266 = vld [vmem:[%s238 + $0x2c] sm:$0xf]
        %v267 = vld [vmem:[%s238 + $0x30] sm:$0xf]
        %v268 = vld [vmem:[%s238 + $0x34] sm:$0xf]
        %v269 = vld [vmem:[%s238 + $0x38] sm:$0xf]
        %v270 = vld [vmem:[%s238 + $0x3c] sm:$0xf]
        %v271 = vld [vmem:[%s238 + $0x40] sm:$0xf]
        %v272 = vld [vmem:[%s238 + $0x44] sm:$0xf]
        %v273 = vld [vmem:[%s238 + $0x48] sm:$0xf]
        %v274 = vld [vmem:[%s238 + $0x4c] sm:$0xf]
        %v275 = vld [vmem:[%s238 + $0x50] sm:$0xf]
        %v276 = vld [vmem:[%s238 + $0x54] sm:$0xf]
        %v277 = vld [vmem:[%s238 + $0x58] sm:$0xf]
        %v278 = vld [vmem:[%s238 + $0x5c] sm:$0xf]
        %v279 = vld [vmem:[%s238 + $0x60] sm:$0xf]
        %v280 = vld [vmem:[%s238 + $0x64] sm:$0xf]
        %v281 = vld [vmem:[%s238 + $0x68] sm:$0xf]
        %v282 = vld [vmem:[%s238 + $0x6c] sm:$0xf]
        %v283 = vld [vmem:[%s238 + $0x70] sm:$0xf]
        %v284 = vld [vmem:[%s238 + $0x74] sm:$0xf]
        %v285 = vld [vmem:[%s238 + $0x78] sm:$0xf]
        %v286 = vld [vmem:[%s238 + $0x7c] sm:$0xf]
        %v287 = vld [vmem:[%s1] sm:$0x3]
        %v288 = vld [vmem:[%s2] sm:$0x1]
        %v290 = vlaneseq
        %v291 = vshrl.u32 %v290, 7
        %v292 = vsub.s32 0, %v291
        %v293 = vrot.slane %v288, %v292
        %v327 = vunpack.c.l.b16 %v255
        %v328 = vunpack.c.l.b16 %v256
        %v329 = vunpack.c.l.b16 %v257
        %v330 = vunpack.c.l.b16 %v258
        %v331 = vunpack.c.l.b16 %v259
        %v332 = vunpack.c.l.b16 %v260
        %v333 = vunpack.c.l.b16 %v261
        %v334 = vunpack.c.l.b16 %v262
        %v335 = vunpack.c.l.b16 %v263
        %v336 = vunpack.c.l.b16 %v264
        %v337 = vunpack.c.l.b16 %v265
        %v338 = vunpack.c.l.b16 %v266
        %v339 = vunpack.c.l.b16 %v267
        %v340 = vunpack.c.l.b16 %v268
        %v341 = vunpack.c.l.b16 %v269
        %v342 = vunpack.c.l.b16 %v270
        %v343 = vunpack.c.l.b16 %v271
        %v344 = vunpack.c.l.b16 %v272
        %v345 = vunpack.c.l.b16 %v273
        %v346 = vunpack.c.l.b16 %v274
        %v347 = vunpack.c.l.b16 %v275
        %v348 = vunpack.c.l.b16 %v276
        %v349 = vunpack.c.l.b16 %v277
        %v350 = vunpack.c.l.b16 %v278
        %v351 = vunpack.c.l.b16 %v279
        %v352 = vunpack.c.l.b16 %v280
        %v353 = vunpack.c.l.b16 %v281
        %v354 = vunpack.c.l.b16 %v282
        %v355 = vunpack.c.l.b16 %v283
        %v356 = vunpack.c.l.b16 %v284
        %v357 = vunpack.c.l.b16 %v285
        %v358 = vunpack.c.l.b16 %v286
        %v359 = vpack.c.b16 %v328, %v327
        %v360 = vpack.c.b16 %v330, %v329
        %v361 = vpack.c.b16 %v332, %v331
        %v362 = vpack.c.b16 %v334, %v333
        %v363 = vpack.c.b16 %v336, %v335
        %v364 = vpack.c.b16 %v338, %v337
        %v365 = vpack.c.b16 %v340, %v339
        %v366 = vpack.c.b16 %v342, %v341
        %v367 = vpack.c.b16 %v344, %v343
        %v368 = vpack.c.b16 %v346, %v345
        %v369 = vpack.c.b16 %v348, %v347
        %v370 = vpack.c.b16 %v350, %v349
        %v371 = vpack.c.b16 %v352, %v351
        %v372 = vpack.c.b16 %v354, %v353
        %v373 = vpack.c.b16 %v356, %v355
        %v374 = vpack.c.b16 %v358, %v357
        %vm375 = vcmask 31744
        %v377 = vsel %vm375, %v359, 0
        %v380 = vsel %vm375, %v360, 0
        %v383 = vsel %vm375, %v361, 0
        %v386 = vsel %vm375, %v362, 0
        %v389 = vsel %vm375, %v363, 0
        %v392 = vsel %vm375, %v364, 0
        %v395 = vsel %vm375, %v365, 0
        %v398 = vsel %vm375, %v366, 0
        %v401 = vsel %vm375, %v367, 0
        %v404 = vsel %vm375, %v368, 0
        %v407 = vsel %vm375, %v369, 0
        %v410 = vsel %vm375, %v370, 0
        %v413 = vsel %vm375, %v371, 0
        %v416 = vsel %vm375, %v372, 0
        %v419 = vsel %vm375, %v373, 0
        %v422 = vsel %vm375, %v374, 0
        %vm424 = vcmask 1041408
        %v426 = vsel %vm424, %v287, 0
        %428 = vmatprep.subr.bf16.mxu0 0
        %429 = vmatpush1.bf16.msra.mxu0 %v426
        %430 = vmatprep.subr.bf16.mxu0 0
        %431 = vmatpush1.bf16.msra.mxu0 0
        %432 = vmatprep.subr.bf16.mxu0 0
        %433 = vmatpush1.bf16.msra.mxu0 0
        %434 = vmatprep.subr.bf16.mxu0 0
        %435 = vmatpush1.bf16.msra.mxu0 0
        %436 = vmatprep.subr.bf16.mxu0 0
        %437 = vmatpush1.bf16.msra.mxu0 0
        %438 = vmatprep.subr.bf16.mxu0 0
        %439 = vmatpush1.bf16.msra.mxu0 0
        %440 = vmatprep.subr.bf16.mxu0 0
        %441 = vmatpush1.bf16.msra.mxu0 0
        %442 = vmatprep.subr.bf16.mxu0 0
        %443 = vmatpush1.bf16.msra.mxu0 0
        %444 = vmatprep.subr.bf16.mxu0 0
        %445 = vmatpush1.bf16.msra.mxu0 0
        %446 = vmatprep.subr.bf16.mxu0 0
        %447 = vmatpush1.bf16.msra.mxu0 0
        %448 = vmatprep.subr.bf16.mxu0 0
        %449 = vmatpush1.bf16.msra.mxu0 0
        %450 = vmatprep.subr.bf16.mxu0 0
        %451 = vmatpush1.bf16.msra.mxu0 0
        %452 = vmatprep.subr.bf16.mxu0 0
        %453 = vmatpush1.bf16.msra.mxu0 0
        %454 = vmatprep.subr.bf16.mxu0 0
        %455 = vmatpush1.bf16.msra.mxu0 0
        %456 = vmatprep.subr.bf16.mxu0 0
        %457 = vmatpush1.bf16.msra.mxu0 0
        %458 = vmatprep.subr.bf16.mxu0 0
        %459 = vmatpush1.bf16.msra.mxu0 0
        %460 = vmatprep.mubr.bf16.mxu0 0
        %461 = vmatmul.mubr.bf16.gmra.mrb[0].mxu0 %v377
        %v462 = vpop.f32.mrb[0].mxu0
        %v463 = vadd.f32 %v293, %v462
        %v464 = vpop.f32.mrb[0].mxu0
        %v465 = vpop.f32.mrb[0].mxu0
        %v466 = vadd.f32 %v293, %v465
        %v467 = vpop.f32.mrb[0].mxu0
        %468 = vmatprep.mubr.bf16.mxu0 0
        %469 = vmatmul.mubr.bf16.gmra.mrb[0].mxu0 %v380
        %v470 = vpop.f32.mrb[0].mxu0
        %v471 = vadd.f32 %v293, %v470
        %v472 = vpop.f32.mrb[0].mxu0
        %v473 = vpop.f32.mrb[0].mxu0
        %v474 = vadd.f32 %v293, %v473
        %v475 = vpop.f32.mrb[0].mxu0
        %476 = vmatprep.mubr.bf16.mxu0 0
        %477 = vmatmul.mubr.bf16.gmra.mrb[0].mxu0 %v383
        %v478 = vpop.f32.mrb[0].mxu0
        %v479 = vadd.f32 %v293, %v478
        %v480 = vpop.f32.mrb[0].mxu0
        %v481 = vpop.f32.mrb[0].mxu0
        %v482 = vadd.f32 %v293, %v481
        %v483 = vpop.f32.mrb[0].mxu0
        %484 = vmatprep.mubr.bf16.mxu0 0
        %485 = vmatmul.mubr.bf16.gmra.mrb[0].mxu0 %v386
        %v486 = vpop.f32.mrb[0].mxu0
        %v487 = vadd.f32 %v293, %v486
        %v488 = vpop.f32.mrb[0].mxu0
        %v489 = vpop.f32.mrb[0].mxu0
        %v490 = vadd.f32 %v293, %v489
        %v491 = vpop.f32.mrb[0].mxu0
        %492 = vmatprep.mubr.bf16.mxu0 0
        %493 = vmatmul.mubr.bf16.gmra.mrb[0].mxu0 %v389
        %v494 = vpop.f32.mrb[0].mxu0
        %v495 = vadd.f32 %v293, %v494
        %v496 = vpop.f32.mrb[0].mxu0
        %v497 = vpop.f32.mrb[0].mxu0
        %v498 = vadd.f32 %v293, %v497
        %v499 = vpop.f32.mrb[0].mxu0
        %500 = vmatprep.mubr.bf16.mxu0 0
        %501 = vmatmul.mubr.bf16.gmra.mrb[0].mxu0 %v392
        %v502 = vpop.f32.mrb[0].mxu0
        %v503 = vadd.f32 %v293, %v502
        %v504 = vpop.f32.mrb[0].mxu0
        %v505 = vpop.f32.mrb[0].mxu0
        %v506 = vadd.f32 %v293, %v505
        %v507 = vpop.f32.mrb[0].mxu0
        %508 = vmatprep.mubr.bf16.mxu0 0
        %509 = vmatmul.mubr.bf16.gmra.mrb[0].mxu0 %v395
        %v510 = vpop.f32.mrb[0].mxu0
        %v511 = vadd.f32 %v293, %v510
        %v512 = vpop.f32.mrb[0].mxu0
        %v513 = vpop.f32.mrb[0].mxu0
        %v514 = vadd.f32 %v293, %v513
        %v515 = vpop.f32.mrb[0].mxu0
        %516 = vmatprep.mubr.bf16.mxu0 0
        %517 = vmatmul.mubr.bf16.gmra.mrb[0].mxu0 %v398
        %v518 = vpop.f32.mrb[0].mxu0
        %v519 = vadd.f32 %v293, %v518
        %v520 = vpop.f32.mrb[0].mxu0
        %v521 = vpop.f32.mrb[0].mxu0
        %v522 = vadd.f32 %v293, %v521
        %v523 = vpop.f32.mrb[0].mxu0
        %524 = vmatprep.mubr.bf16.mxu0 0
        %525 = vmatmul.mubr.bf16.gmra.mrb[0].mxu0 %v401
        %v526 = vpop.f32.mrb[0].mxu0
        %v527 = vadd.f32 %v293, %v526
        %v528 = vpop.f32.mrb[0].mxu0
        %v529 = vpop.f32.mrb[0].mxu0
        %v530 = vadd.f32 %v293, %v529
        %v531 = vpop.f32.mrb[0].mxu0
        %532 = vmatprep.mubr.bf16.mxu0 0
        %533 = vmatmul.mubr.bf16.gmra.mrb[0].mxu0 %v404
        %v534 = vpop.f32.mrb[0].mxu0
        %v535 = vadd.f32 %v293, %v534
        %v536 = vpop.f32.mrb[0].mxu0
        %v537 = vpop.f32.mrb[0].mxu0
        %v538 = vadd.f32 %v293, %v537
        %v539 = vpop.f32.mrb[0].mxu0
        %540 = vmatprep.mubr.bf16.mxu0 0
        %541 = vmatmul.mubr.bf16.gmra.mrb[0].mxu0 %v407
        %v542 = vpop.f32.mrb[0].mxu0
        %v543 = vadd.f32 %v293, %v542
        %v544 = vpop.f32.mrb[0].mxu0
        %v545 = vpop.f32.mrb[0].mxu0
        %v546 = vadd.f32 %v293, %v545
        %v547 = vpop.f32.mrb[0].mxu0
        %548 = vmatprep.mubr.bf16.mxu0 0
        %549 = vmatmul.mubr.bf16.gmra.mrb[0].mxu0 %v410
        %v550 = vpop.f32.mrb[0].mxu0
        %v551 = vadd.f32 %v293, %v550
        %v552 = vpop.f32.mrb[0].mxu0
        %v553 = vpop.f32.mrb[0].mxu0
        %v554 = vadd.f32 %v293, %v553
        %v555 = vpop.f32.mrb[0].mxu0
        %556 = vmatprep.mubr.bf16.mxu0 0
        %557 = vmatmul.mubr.bf16.gmra.mrb[0].mxu0 %v413
        %v558 = vpop.f32.mrb[0].mxu0
        %v559 = vadd.f32 %v293, %v558
        %v560 = vpop.f32.mrb[0].mxu0
        %v561 = vpop.f32.mrb[0].mxu0
        %v562 = vadd.f32 %v293, %v561
        %v563 = vpop.f32.mrb[0].mxu0
        %564 = vmatprep.mubr.bf16.mxu0 0
        %565 = vmatmul.mubr.bf16.gmra.mrb[0].mxu0 %v416
        %v566 = vpop.f32.mrb[0].mxu0
        %v567 = vadd.f32 %v293, %v566
        %v568 = vpop.f32.mrb[0].mxu0
        %v569 = vpop.f32.mrb[0].mxu0
        %v570 = vadd.f32 %v293, %v569
        %v571 = vpop.f32.mrb[0].mxu0
        %572 = vmatprep.mubr.bf16.mxu0 0
        %573 = vmatmul.mubr.bf16.gmra.mrb[0].mxu0 %v419
        %v574 = vpop.f32.mrb[0].mxu0
        %v575 = vadd.f32 %v293, %v574
        %v576 = vpop.f32.mrb[0].mxu0
        %v577 = vpop.f32.mrb[0].mxu0
        %v578 = vadd.f32 %v293, %v577
        %v579 = vpop.f32.mrb[0].mxu0
        %580 = vmatprep.mubr.bf16.mxu0 0
        %581 = vmatmul.mubr.bf16.gmra.mrb[0].mxu0 %v422
        %v582 = vpop.f32.mrb[0].mxu0
        %v583 = vadd.f32 %v293, %v582
        %v584 = vpop.f32.mrb[0].mxu0
        %v585 = vpop.f32.mrb[0].mxu0
        %v586 = vadd.f32 %v293, %v585
        %v587 = vpop.f32.mrb[0].mxu0
        %588 = vdwg.mxu0
        %v589 = vxor.u32 %v463, 2147483648
        %v590 = vxor.u32 %v466, 2147483648
        %v591 = vxor.u32 %v471, 2147483648
        %v592 = vxor.u32 %v474, 2147483648
        %v593 = vxor.u32 %v479, 2147483648
        %v594 = vxor.u32 %v482, 2147483648
        %v595 = vxor.u32 %v487, 2147483648
        %v596 = vxor.u32 %v490, 2147483648
        %v597 = vxor.u32 %v495, 2147483648
        %v598 = vxor.u32 %v498, 2147483648
        %v599 = vxor.u32 %v503, 2147483648
        %v600 = vxor.u32 %v506, 2147483648
        %v601 = vxor.u32 %v511, 2147483648
        %v602 = vxor.u32 %v514, 2147483648
        %v603 = vxor.u32 %v519, 2147483648
        %v604 = vxor.u32 %v522, 2147483648
        %v605 = vxor.u32 %v527, 2147483648
        %v606 = vxor.u32 %v530, 2147483648
        %v607 = vxor.u32 %v535, 2147483648
        %v608 = vxor.u32 %v538, 2147483648
        %v609 = vxor.u32 %v543, 2147483648
        %v610 = vxor.u32 %v546, 2147483648
        %v611 = vxor.u32 %v551, 2147483648
        %v612 = vxor.u32 %v554, 2147483648
        %v613 = vxor.u32 %v559, 2147483648
        %v614 = vxor.u32 %v562, 2147483648
        %v615 = vxor.u32 %v567, 2147483648
        %v616 = vxor.u32 %v570, 2147483648
        %v617 = vxor.u32 %v575, 2147483648
        %v618 = vxor.u32 %v578, 2147483648
        %v619 = vxor.u32 %v583, 2147483648
        %v620 = vxor.u32 %v586, 2147483648
        %v621 = vmul.f32 %v589, 1.442695
        %v622 = vpow.pop %v621
        %v623 = vmul.f32 %v590, 1.442695
        %v624 = vpow.pop %v623
        %v625 = vmul.f32 %v591, 1.442695
        %v626 = vpow.pop %v625
        %v627 = vmul.f32 %v592, 1.442695
        %v628 = vpow.pop %v627
        %v629 = vmul.f32 %v593, 1.442695
        %v630 = vpow.pop %v629
        %v631 = vmul.f32 %v594, 1.442695
        %v632 = vpow.pop %v631
        %v633 = vmul.f32 %v595, 1.442695
        %v634 = vpow.pop %v633
        %v635 = vmul.f32 %v596, 1.442695
        %v636 = vpow.pop %v635
        %v637 = vmul.f32 %v597, 1.442695
        %v638 = vpow.pop %v637
        %v639 = vmul.f32 %v598, 1.442695
        %v640 = vpow.pop %v639
        %v641 = vmul.f32 %v599, 1.442695
        %v642 = vpow.pop %v641
        %v643 = vmul.f32 %v600, 1.442695
        %v644 = vpow.pop %v643
        %v645 = vmul.f32 %v601, 1.442695
        %v646 = vpow.pop %v645
        %v647 = vmul.f32 %v602, 1.442695
        %v648 = vpow.pop %v647
        %v649 = vmul.f32 %v603, 1.442695
        %v650 = vpow.pop %v649
        %v651 = vmul.f32 %v604, 1.442695
        %v652 = vpow.pop %v651
        %v653 = vmul.f32 %v605, 1.442695
        %v654 = vpow.pop %v653
        %v655 = vmul.f32 %v606, 1.442695
        %v656 = vpow.pop %v655
        %v657 = vmul.f32 %v607, 1.442695
        %v658 = vpow.pop %v657
        %v659 = vmul.f32 %v608, 1.442695
        %v660 = vpow.pop %v659
        %v661 = vmul.f32 %v609, 1.442695
        %v662 = vpow.pop %v661
        %v663 = vmul.f32 %v610, 1.442695
        %v664 = vpow.pop %v663
        %v665 = vmul.f32 %v611, 1.442695
        %v666 = vpow.pop %v665
        %v667 = vmul.f32 %v612, 1.442695
        %v668 = vpow.pop %v667
        %v669 = vmul.f32 %v613, 1.442695
        %v670 = vpow.pop %v669
        %v671 = vmul.f32 %v614, 1.442695
        %v672 = vpow.pop %v671
        %v673 = vmul.f32 %v615, 1.442695
        %v674 = vpow.pop %v673
        %v675 = vmul.f32 %v616, 1.442695
        %v676 = vpow.pop %v675
        %v677 = vmul.f32 %v617, 1.442695
        %v678 = vpow.pop %v677
        %v679 = vmul.f32 %v618, 1.442695
        %v680 = vpow.pop %v679
        %v681 = vmul.f32 %v619, 1.442695
        %v682 = vpow.pop %v681
        %v683 = vmul.f32 %v620, 1.442695
        %v684 = vpow.pop %v683
        %v685 = vadd.f32 %v622, 1.0
        %v686 = vadd.f32 %v624, 1.0
        %v687 = vadd.f32 %v626, 1.0
        %v688 = vadd.f32 %v628, 1.0
        %v689 = vadd.f32 %v630, 1.0
        %v690 = vadd.f32 %v632, 1.0
        %v691 = vadd.f32 %v634, 1.0
        %v692 = vadd.f32 %v636, 1.0
        %v693 = vadd.f32 %v638, 1.0
        %v694 = vadd.f32 %v640, 1.0
        %v695 = vadd.f32 %v642, 1.0
        %v696 = vadd.f32 %v644, 1.0
        %v697 = vadd.f32 %v646, 1.0
        %v698 = vadd.f32 %v648, 1.0
        %v699 = vadd.f32 %v650, 1.0
        %v700 = vadd.f32 %v652, 1.0
        %v701 = vadd.f32 %v654, 1.0
        %v702 = vadd.f32 %v656, 1.0
        %v703 = vadd.f32 %v658, 1.0
        %v704 = vadd.f32 %v660, 1.0
        %v705 = vadd.f32 %v662, 1.0
        %v706 = vadd.f32 %v664, 1.0
        %v707 = vadd.f32 %v666, 1.0
        %v708 = vadd.f32 %v668, 1.0
        %v709 = vadd.f32 %v670, 1.0
        %v710 = vadd.f32 %v672, 1.0
        %v711 = vadd.f32 %v674, 1.0
        %v712 = vadd.f32 %v676, 1.0
        %v713 = vadd.f32 %v678, 1.0
        %v714 = vadd.f32 %v680, 1.0
        %v715 = vadd.f32 %v682, 1.0
        %v716 = vadd.f32 %v684, 1.0
        %v717 = vrcp.pop %v685
        %v718 = vmul.f32 1.0, %v717
        %v719 = vrcp.pop %v686
        %v720 = vmul.f32 1.0, %v719
        %v721 = vrcp.pop %v687
        %v722 = vmul.f32 1.0, %v721
        %v723 = vrcp.pop %v688
        %v724 = vmul.f32 1.0, %v723
        %v725 = vrcp.pop %v689
        %v726 = vmul.f32 1.0, %v725
        %v727 = vrcp.pop %v690
        %v728 = vmul.f32 1.0, %v727
        %v729 = vrcp.pop %v691
        %v730 = vmul.f32 1.0, %v729
        %v731 = vrcp.pop %v692
        %v732 = vmul.f32 1.0, %v731
        %v733 = vrcp.pop %v693
        %v734 = vmul.f32 1.0, %v733
        %v735 = vrcp.pop %v694
        %v736 = vmul.f32 1.0, %v735
        %v737 = vrcp.pop %v695
        %v738 = vmul.f32 1.0, %v737
        %v739 = vrcp.pop %v696
        %v740 = vmul.f32 1.0, %v739
        %v741 = vrcp.pop %v697
        %v742 = vmul.f32 1.0, %v741
        %v743 = vrcp.pop %v698
        %v744 = vmul.f32 1.0, %v743
        %v745 = vrcp.pop %v699
        %v746 = vmul.f32 1.0, %v745
        %v747 = vrcp.pop %v700
        %v748 = vmul.f32 1.0, %v747
        %v749 = vrcp.pop %v701
        %v750 = vmul.f32 1.0, %v749
        %v751 = vrcp.pop %v702
        %v752 = vmul.f32 1.0, %v751
        %v753 = vrcp.pop %v703
        %v754 = vmul.f32 1.0, %v753
        %v755 = vrcp.pop %v704
        %v756 = vmul.f32 1.0, %v755
        %v757 = vrcp.pop %v705
        %v758 = vmul.f32 1.0, %v757
        %v759 = vrcp.pop %v706
        %v760 = vmul.f32 1.0, %v759
        %v761 = vrcp.pop %v707
        %v762 = vmul.f32 1.0, %v761
        %v763 = vrcp.pop %v708
        %v764 = vmul.f32 1.0, %v763
        %v765 = vrcp.pop %v709
        %v766 = vmul.f32 1.0, %v765
        %v767 = vrcp.pop %v710
        %v768 = vmul.f32 1.0, %v767
        %v769 = vrcp.pop %v711
        %v770 = vmul.f32 1.0, %v769
        %v771 = vrcp.pop %v712
        %v772 = vmul.f32 1.0, %v771
        %v773 = vrcp.pop %v713
        %v774 = vmul.f32 1.0, %v773
        %v775 = vrcp.pop %v714
        %v776 = vmul.f32 1.0, %v775
        %v777 = vrcp.pop %v715
        %v778 = vmul.f32 1.0, %v777
        %v779 = vrcp.pop %v716
        %v780 = vmul.f32 1.0, %v779
        %v781 = vmul.f32 %v463, %v718
        %v782 = vmul.f32 %v466, %v720
        %v783 = vmul.f32 %v471, %v722
        %v784 = vmul.f32 %v474, %v724
        %v785 = vmul.f32 %v479, %v726
        %v786 = vmul.f32 %v482, %v728
        %v787 = vmul.f32 %v487, %v730
        %v788 = vmul.f32 %v490, %v732
        %v789 = vmul.f32 %v495, %v734
        %v790 = vmul.f32 %v498, %v736
        %v791 = vmul.f32 %v503, %v738
        %v792 = vmul.f32 %v506, %v740
        %v793 = vmul.f32 %v511, %v742
        %v794 = vmul.f32 %v514, %v744
        %v795 = vmul.f32 %v519, %v746
        %v796 = vmul.f32 %v522, %v748
        %v797 = vmul.f32 %v527, %v750
        %v798 = vmul.f32 %v530, %v752
        %v799 = vmul.f32 %v535, %v754
        %v800 = vmul.f32 %v538, %v756
        %v801 = vmul.f32 %v543, %v758
        %v802 = vmul.f32 %v546, %v760
        %v803 = vmul.f32 %v551, %v762
        %v804 = vmul.f32 %v554, %v764
        %v805 = vmul.f32 %v559, %v766
        %v806 = vmul.f32 %v562, %v768
        %v807 = vmul.f32 %v567, %v770
        %v808 = vmul.f32 %v570, %v772
        %v809 = vmul.f32 %v575, %v774
        %v810 = vmul.f32 %v578, %v776
        %v811 = vmul.f32 %v583, %v778
        %v812 = vmul.f32 %v586, %v780
        %vm845 = vcmask 1040384
        %v846 = vrot.slane %v781, 7
        %v847 = vrot.slane %v782, 7
        %v848 = vsel %vm845, %v846, %v847
        %v849 = vrot.slane %v783, 7
        %v850 = vrot.slane %v784, 7
        %v851 = vsel %vm845, %v849, %v850
        %v852 = vrot.slane %v785, 7
        %v853 = vrot.slane %v786, 7
        %v854 = vsel %vm845, %v852, %v853
        %v855 = vrot.slane %v787, 7
        %v856 = vrot.slane %v788, 7
        %v857 = vsel %vm845, %v855, %v856
        %v858 = vrot.slane %v789, 7
        %v859 = vrot.slane %v790, 7
        %v860 = vsel %vm845, %v858, %v859
        %v861 = vrot.slane %v791, 7
        %v862 = vrot.slane %v792, 7
        %v863 = vsel %vm845, %v861, %v862
        %v864 = vrot.slane %v793, 7
        %v865 = vrot.slane %v794, 7
        %v866 = vsel %vm845, %v864, %v865
        %v867 = vrot.slane %v795, 7
        %v868 = vrot.slane %v796, 7
        %v869 = vsel %vm845, %v867, %v868
        %v870 = vrot.slane %v797, 7
        %v871 = vrot.slane %v798, 7
        %v872 = vsel %vm845, %v870, %v871
        %v873 = vrot.slane %v799, 7
        %v874 = vrot.slane %v800, 7
        %v875 = vsel %vm845, %v873, %v874
        %v876 = vrot.slane %v801, 7
        %v877 = vrot.slane %v802, 7
        %v878 = vsel %vm845, %v876, %v877
        %v879 = vrot.slane %v803, 7
        %v880 = vrot.slane %v804, 7
        %v881 = vsel %vm845, %v879, %v880
        %v882 = vrot.slane %v805, 7
        %v883 = vrot.slane %v806, 7
        %v884 = vsel %vm845, %v882, %v883
        %v885 = vrot.slane %v807, 7
        %v886 = vrot.slane %v808, 7
        %v887 = vsel %vm845, %v885, %v886
        %v888 = vrot.slane %v809, 7
        %v889 = vrot.slane %v810, 7
        %v890 = vsel %vm845, %v888, %v889
        %v891 = vrot.slane %v811, 7
        %v892 = vrot.slane %v812, 7
        %v893 = vsel %vm845, %v891, %v892
        %v926 = vsel %vm845, 0.0, %v846
        %v927 = vsel %vm845, 0.0, %v849
        %v928 = vsel %vm845, 0.0, %v852
        %v929 = vsel %vm845, 0.0, %v855
        %v930 = vsel %vm845, 0.0, %v858
        %v931 = vsel %vm845, 0.0, %v861
        %v932 = vsel %vm845, 0.0, %v864
        %v933 = vsel %vm845, 0.0, %v867
        %v934 = vsel %vm845, 0.0, %v870
        %v935 = vsel %vm845, 0.0, %v873
        %v936 = vsel %vm845, 0.0, %v876
        %v937 = vsel %vm845, 0.0, %v879
        %v938 = vsel %vm845, 0.0, %v882
        %v939 = vsel %vm845, 0.0, %v885
        %v940 = vsel %vm845, 0.0, %v888
        %v941 = vsel %vm845, 0.0, %v891
        %vm942 = vcmask 1046528
        %v943 = vrot.slane %v781, 1
        %v944 = vrot.slane %v782, 1
        %v945 = vsel %vm942, %v943, %v944
        %v946 = vrot.slane %v783, 1
        %v947 = vrot.slane %v784, 1
        %v948 = vsel %vm942, %v946, %v947
        %v949 = vrot.slane %v785, 1
        %v950 = vrot.slane %v786, 1
        %v951 = vsel %vm942, %v949, %v950
        %v952 = vrot.slane %v787, 1
        %v953 = vrot.slane %v788, 1
        %v954 = vsel %vm942, %v952, %v953
        %v955 = vrot.slane %v789, 1
        %v956 = vrot.slane %v790, 1
        %v957 = vsel %vm942, %v955, %v956
        %v958 = vrot.slane %v791, 1
        %v959 = vrot.slane %v792, 1
        %v960 = vsel %vm942, %v958, %v959
        %v961 = vrot.slane %v793, 1
        %v962 = vrot.slane %v794, 1
        %v963 = vsel %vm942, %v961, %v962
        %v964 = vrot.slane %v795, 1
        %v965 = vrot.slane %v796, 1
        %v966 = vsel %vm942, %v964, %v965
        %v967 = vrot.slane %v797, 1
        %v968 = vrot.slane %v798, 1
        %v969 = vsel %vm942, %v967, %v968
        %v970 = vrot.slane %v799, 1
        %v971 = vrot.slane %v800, 1
        %v972 = vsel %vm942, %v970, %v971
        %v973 = vrot.slane %v801, 1
        %v974 = vrot.slane %v802, 1
        %v975 = vsel %vm942, %v973, %v974
        %v976 = vrot.slane %v803, 1
        %v977 = vrot.slane %v804, 1
        %v978 = vsel %vm942, %v976, %v977
        %v979 = vrot.slane %v805, 1
        %v980 = vrot.slane %v806, 1
        %v981 = vsel %vm942, %v979, %v980
        %v982 = vrot.slane %v807, 1
        %v983 = vrot.slane %v808, 1
        %v984 = vsel %vm942, %v982, %v983
        %v985 = vrot.slane %v809, 1
        %v986 = vrot.slane %v810, 1
        %v987 = vsel %vm942, %v985, %v986
        %v988 = vrot.slane %v811, 1
        %v989 = vrot.slane %v812, 1
        %v990 = vsel %vm942, %v988, %v989
        %v1007 = vsel %vm942, %v944, 0.0
        %v1008 = vsel %vm942, %v947, 0.0
        %v1009 = vsel %vm942, %v950, 0.0
        %v1010 = vsel %vm942, %v953, 0.0
        %v1011 = vsel %vm942, %v956, 0.0
        %v1012 = vsel %vm942, %v959, 0.0
        %v1013 = vsel %vm942, %v962, 0.0
        %v1014 = vsel %vm942, %v965, 0.0
        %v1015 = vsel %vm942, %v968, 0.0
        %v1016 = vsel %vm942, %v971, 0.0
        %v1017 = vsel %vm942, %v974, 0.0
        %v1018 = vsel %vm942, %v977, 0.0
        %v1019 = vsel %vm942, %v980, 0.0
        %v1020 = vsel %vm942, %v983, 0.0
        %v1021 = vsel %vm942, %v986, 0.0
        %v1022 = vsel %vm942, %v989, 0.0
        %1023 = vrot.lane.b32.xlu0 %v781, 2
        %v1024 = vpop.permute.xlu0 %1023
        %1025 = vrot.lane.b32.xlu0 %v782, 2
        %v1026 = vpop.permute.xlu0 %1025
        %1027 = vrot.lane.b32.xlu0 %v783, 2
        %v1028 = vpop.permute.xlu0 %1027
        %1029 = vrot.lane.b32.xlu0 %v784, 2
        %v1030 = vpop.permute.xlu0 %1029
        %1031 = vrot.lane.b32.xlu0 %v785, 2
        %v1032 = vpop.permute.xlu0 %1031
        %1033 = vrot.lane.b32.xlu0 %v786, 2
        %v1034 = vpop.permute.xlu0 %1033
        %1035 = vrot.lane.b32.xlu0 %v787, 2
        %v1036 = vpop.permute.xlu0 %1035
        %1037 = vrot.lane.b32.xlu0 %v788, 2
        %v1038 = vpop.permute.xlu0 %1037
        %1039 = vrot.lane.b32.xlu0 %v789, 2
        %v1040 = vpop.permute.xlu0 %1039
        %1041 = vrot.lane.b32.xlu0 %v790, 2
        %v1042 = vpop.permute.xlu0 %1041
        %1043 = vrot.lane.b32.xlu0 %v791, 2
        %v1044 = vpop.permute.xlu0 %1043
        %1045 = vrot.lane.b32.xlu0 %v792, 2
        %v1046 = vpop.permute.xlu0 %1045
        %1047 = vrot.lane.b32.xlu0 %v793, 2
        %v1048 = vpop.permute.xlu0 %1047
        %1049 = vrot.lane.b32.xlu0 %v794, 2
        %v1050 = vpop.permute.xlu0 %1049
        %1051 = vrot.lane.b32.xlu0 %v795, 2
        %v1052 = vpop.permute.xlu0 %1051
        %1053 = vrot.lane.b32.xlu0 %v796, 2
        %v1054 = vpop.permute.xlu0 %1053
        %1055 = vrot.lane.b32.xlu0 %v797, 2
        %v1056 = vpop.permute.xlu0 %1055
        %1057 = vrot.lane.b32.xlu0 %v798, 2
        %v1058 = vpop.permute.xlu0 %1057
        %1059 = vrot.lane.b32.xlu0 %v799, 2
        %v1060 = vpop.permute.xlu0 %1059
        %1061 = vrot.lane.b32.xlu0 %v800, 2
        %v1062 = vpop.permute.xlu0 %1061
        %1063 = vrot.lane.b32.xlu0 %v801, 2
        %v1064 = vpop.permute.xlu0 %1063
        %1065 = vrot.lane.b32.xlu0 %v802, 2
        %v1066 = vpop.permute.xlu0 %1065
        %1067 = vrot.lane.b32.xlu0 %v803, 2
        %v1068 = vpop.permute.xlu0 %1067
        %1069 = vrot.lane.b32.xlu0 %v804, 2
        %v1070 = vpop.permute.xlu0 %1069
        %1071 = vrot.lane.b32.xlu0 %v805, 2
        %v1072 = vpop.permute.xlu0 %1071
        %1073 = vrot.lane.b32.xlu0 %v806, 2
        %v1074 = vpop.permute.xlu0 %1073
        %1075 = vrot.lane.b32.xlu0 %v807, 2
        %v1076 = vpop.permute.xlu0 %1075
        %1077 = vrot.lane.b32.xlu0 %v808, 2
        %v1078 = vpop.permute.xlu0 %1077
        %1079 = vrot.lane.b32.xlu0 %v809, 2
        %v1080 = vpop.permute.xlu0 %1079
        %1081 = vrot.lane.b32.xlu0 %v810, 2
        %v1082 = vpop.permute.xlu0 %1081
        %1083 = vrot.lane.b32.xlu0 %v811, 2
        %v1084 = vpop.permute.xlu0 %1083
        %1085 = vrot.lane.b32.xlu0 %v812, 2
        %v1086 = vpop.permute.xlu0 %1085
        %1135 = vrot.lane.b32.xlu0 %v945, 4
        %v1136 = vpop.permute.xlu0 %1135
        %1137 = vrot.lane.b32.xlu0 %v1007, 4
        %v1138 = vpop.permute.xlu0 %1137
        %1139 = vrot.lane.b32.xlu0 %v948, 4
        %v1140 = vpop.permute.xlu0 %1139
        %1141 = vrot.lane.b32.xlu0 %v1008, 4
        %v1142 = vpop.permute.xlu0 %1141
        %1143 = vrot.lane.b32.xlu0 %v951, 4
        %v1144 = vpop.permute.xlu0 %1143
        %1145 = vrot.lane.b32.xlu0 %v1009, 4
        %v1146 = vpop.permute.xlu0 %1145
        %1147 = vrot.lane.b32.xlu0 %v954, 4
        %v1148 = vpop.permute.xlu0 %1147
        %1149 = vrot.lane.b32.xlu0 %v1010, 4
        %v1150 = vpop.permute.xlu0 %1149
        %1151 = vrot.lane.b32.xlu0 %v957, 4
        %v1152 = vpop.permute.xlu0 %1151
        %1153 = vrot.lane.b32.xlu0 %v1011, 4
        %v1154 = vpop.permute.xlu0 %1153
        %1155 = vrot.lane.b32.xlu0 %v960, 4
        %v1156 = vpop.permute.xlu0 %1155
        %1157 = vrot.lane.b32.xlu0 %v1012, 4
        %v1158 = vpop.permute.xlu0 %1157
        %1159 = vrot.lane.b32.xlu0 %v963, 4
        %v1160 = vpop.permute.xlu0 %1159
        %1161 = vrot.lane.b32.xlu0 %v1013, 4
        %v1162 = vpop.permute.xlu0 %1161
        %1163 = vrot.lane.b32.xlu0 %v966, 4
        %v1164 = vpop.permute.xlu0 %1163
        %1165 = vrot.lane.b32.xlu0 %v1014, 4
        %v1166 = vpop.permute.xlu0 %1165
        %1167 = vrot.lane.b32.xlu0 %v969, 4
        %v1168 = vpop.permute.xlu0 %1167
        %1169 = vrot.lane.b32.xlu0 %v1015, 4
        %v1170 = vpop.permute.xlu0 %1169
        %1171 = vrot.lane.b32.xlu0 %v972, 4
        %v1172 = vpop.permute.xlu0 %1171
        %1173 = vrot.lane.b32.xlu0 %v1016, 4
        %v1174 = vpop.permute.xlu0 %1173
        %1175 = vrot.lane.b32.xlu0 %v975, 4
        %v1176 = vpop.permute.xlu0 %1175
        %1177 = vrot.lane.b32.xlu0 %v1017, 4
        %v1178 = vpop.permute.xlu0 %1177
        %1179 = vrot.lane.b32.xlu0 %v978, 4
        %v1180 = vpop.permute.xlu0 %1179
        %1181 = vrot.lane.b32.xlu0 %v1018, 4
        %v1182 = vpop.permute.xlu0 %1181
        %1183 = vrot.lane.b32.xlu0 %v981, 4
        %v1184 = vpop.permute.xlu0 %1183
        %1185 = vrot.lane.b32.xlu0 %v1019, 4
        %v1186 = vpop.permute.xlu0 %1185
        %1187 = vrot.lane.b32.xlu0 %v984, 4
        %v1188 = vpop.permute.xlu0 %1187
        %1189 = vrot.lane.b32.xlu0 %v1020, 4
        %v1190 = vpop.permute.xlu0 %1189
        %1191 = vrot.lane.b32.xlu0 %v987, 4
        %v1192 = vpop.permute.xlu0 %1191
        %1193 = vrot.lane.b32.xlu0 %v1021, 4
        %v1194 = vpop.permute.xlu0 %1193
        %1195 = vrot.lane.b32.xlu0 %v990, 4
        %v1196 = vpop.permute.xlu0 %1195
        %1197 = vrot.lane.b32.xlu0 %v1022, 4
        %v1198 = vpop.permute.xlu0 %1197
        %vm1231 = vcmask 15360
        %v1232 = vsel %vm1231, %v926, %v1024
        %v1233 = vsel %vm1231, %v848, %v1026
        %v1234 = vsel %vm1231, %v927, %v1028
        %v1235 = vsel %vm1231, %v851, %v1030
        %v1236 = vsel %vm1231, %v928, %v1032
        %v1237 = vsel %vm1231, %v854, %v1034
        %v1238 = vsel %vm1231, %v929, %v1036
        %v1239 = vsel %vm1231, %v857, %v1038
        %v1240 = vsel %vm1231, %v930, %v1040
        %v1241 = vsel %vm1231, %v860, %v1042
        %v1242 = vsel %vm1231, %v931, %v1044
        %v1243 = vsel %vm1231, %v863, %v1046
        %v1244 = vsel %vm1231, %v932, %v1048
        %v1245 = vsel %vm1231, %v866, %v1050
        %v1246 = vsel %vm1231, %v933, %v1052
        %v1247 = vsel %vm1231, %v869, %v1054
        %v1248 = vsel %vm1231, %v934, %v1056
        %v1249 = vsel %vm1231, %v872, %v1058
        %v1250 = vsel %vm1231, %v935, %v1060
        %v1251 = vsel %vm1231, %v875, %v1062
        %v1252 = vsel %vm1231, %v936, %v1064
        %v1253 = vsel %vm1231, %v878, %v1066
        %v1254 = vsel %vm1231, %v937, %v1068
        %v1255 = vsel %vm1231, %v881, %v1070
        %v1256 = vsel %vm1231, %v938, %v1072
        %v1257 = vsel %vm1231, %v884, %v1074
        %v1258 = vsel %vm1231, %v939, %v1076
        %v1259 = vsel %vm1231, %v887, %v1078
        %v1260 = vsel %vm1231, %v940, %v1080
        %v1261 = vsel %vm1231, %v890, %v1082
        %v1262 = vsel %vm1231, %v941, %v1084
        %v1263 = vsel %vm1231, %v893, %v1086
        %v1264 = vsel %vm375, %v1232, %v1136
        %v1265 = vsel %vm375, %v1233, %v1138
        %v1266 = vsel %vm375, %v1234, %v1140
        %v1267 = vsel %vm375, %v1235, %v1142
        %v1268 = vsel %vm375, %v1236, %v1144
        %v1269 = vsel %vm375, %v1237, %v1146
        %v1270 = vsel %vm375, %v1238, %v1148
        %v1271 = vsel %vm375, %v1239, %v1150
        %v1272 = vsel %vm375, %v1240, %v1152
        %v1273 = vsel %vm375, %v1241, %v1154
        %v1274 = vsel %vm375, %v1242, %v1156
        %v1275 = vsel %vm375, %v1243, %v1158
        %v1276 = vsel %vm375, %v1244, %v1160
        %v1277 = vsel %vm375, %v1245, %v1162
        %v1278 = vsel %vm375, %v1246, %v1164
        %v1279 = vsel %vm375, %v1247, %v1166
        %v1280 = vsel %vm375, %v1248, %v1168
        %v1281 = vsel %vm375, %v1249, %v1170
        %v1282 = vsel %vm375, %v1250, %v1172
        %v1283 = vsel %vm375, %v1251, %v1174
        %v1284 = vsel %vm375, %v1252, %v1176
        %v1285 = vsel %vm375, %v1253, %v1178
        %v1286 = vsel %vm375, %v1254, %v1180
        %v1287 = vsel %vm375, %v1255, %v1182
        %v1288 = vsel %vm375, %v1256, %v1184
        %v1289 = vsel %vm375, %v1257, %v1186
        %v1290 = vsel %vm375, %v1258, %v1188
        %v1291 = vsel %vm375, %v1259, %v1190
        %v1292 = vsel %vm375, %v1260, %v1192
        %v1293 = vsel %vm375, %v1261, %v1194
        %v1294 = vsel %vm375, %v1262, %v1196
        %v1295 = vsel %vm375, %v1263, %v1198
        %vm1296 = vcmask 48128
        %1297 = vst.msk [vmem:[#allocation2] sm:$0xff] %vm1296, 0
        %s1298 = scalar_lea.vmem [#allocation2], 136
        %1299 = vst.msk [vmem:[%s1298] sm:$0xff] %vm1296, 0
        %v1300 = vpack.c.bf16 %v1265, %v1264
        %v1301 = vpack.c.bf16 %v1267, %v1266
        %v1302 = vpack.c.bf16 %v1269, %v1268
        %v1303 = vpack.c.bf16 %v1271, %v1270
        %v1304 = vpack.c.bf16 %v1273, %v1272
        %v1305 = vpack.c.bf16 %v1275, %v1274
        %v1306 = vpack.c.bf16 %v1277, %v1276
        %v1307 = vpack.c.bf16 %v1279, %v1278
        %v1308 = vpack.c.bf16 %v1281, %v1280
        %v1309 = vpack.c.bf16 %v1283, %v1282
        %v1310 = vpack.c.bf16 %v1285, %v1284
        %v1311 = vpack.c.bf16 %v1287, %v1286
        %v1312 = vpack.c.bf16 %v1289, %v1288
        %v1313 = vpack.c.bf16 %v1291, %v1290
        %v1314 = vpack.c.bf16 %v1293, %v1292
        %v1315 = vpack.c.bf16 %v1295, %v1294
        %s1316 = scalar_lea.vmem [#allocation2], 8
        %1317 = vst.msk [vmem:[%s1316] sm:$0xff] %vm1296, %v1300
        %1318 = vst.msk [vmem:[%s1316 + $0x8] sm:$0xff] %vm1296, %v1301
        %1319 = vst.msk [vmem:[%s1316 + $0x10] sm:$0xff] %vm1296, %v1302
        %1320 = vst.msk [vmem:[%s1316 + $0x18] sm:$0xff] %vm1296, %v1303
        %1321 = vst.msk [vmem:[%s1316 + $0x20] sm:$0xff] %vm1296, %v1304
        %1322 = vst.msk [vmem:[%s1316 + $0x28] sm:$0xff] %vm1296, %v1305
        %1323 = vst.msk [vmem:[%s1316 + $0x30] sm:$0xff] %vm1296, %v1306
        %1324 = vst.msk [vmem:[%s1316 + $0x38] sm:$0xff] %vm1296, %v1307
        %1325 = vst.msk [vmem:[%s1316 + $0x40] sm:$0xff] %vm1296, %v1308
        %1326 = vst.msk [vmem:[%s1316 + $0x48] sm:$0xff] %vm1296, %v1309
        %1327 = vst.msk [vmem:[%s1316 + $0x50] sm:$0xff] %vm1296, %v1310
        %1328 = vst.msk [vmem:[%s1316 + $0x58] sm:$0xff] %vm1296, %v1311
        %1329 = vst.msk [vmem:[%s1316 + $0x60] sm:$0xff] %vm1296, %v1312
        %1330 = vst.msk [vmem:[%s1316 + $0x68] sm:$0xff] %vm1296, %v1313
        %1331 = vst.msk [vmem:[%s1316 + $0x70] sm:$0xff] %vm1296, %v1314
        %1332 = vst.msk [vmem:[%s1316 + $0x78] sm:$0xff] %vm1296, %v1315
      $region44: #{tpu_custom_call.1} parent=39 // pred_fallthru
        _
      %s1333 = smul.u32 %s21, 8
      %s1334 = smul.addr %s1333, 8
      %s1335 = scalar_lea.vmem [#allocation2], %s1334
      %v1336 = vld [vmem:[%s1335] sm:$0xff]
      %v1337 = vld [vmem:[%s1335 + $0x8] sm:$0xff]
      %v1338 = vld [vmem:[%s1335 + $0x10] sm:$0xff]
      %v1339 = vld [vmem:[%s1335 + $0x18] sm:$0xff]
      %v1340 = vld [vmem:[%s1335 + $0x20] sm:$0xff]
      %v1341 = vld [vmem:[%s1335 + $0x28] sm:$0xff]
      %v1342 = vld [vmem:[%s1335 + $0x30] sm:$0xff]
      %v1343 = vld [vmem:[%s1335 + $0x38] sm:$0xff]
      %v1344 = vld [vmem:[%s3] sm:$0x7]
      %s1345 = sadd.s32 %s1333, 1
      %s1346 = smul.addr %s1345, 8
      %s1347 = scalar_lea.vmem [#allocation2], %s1346
      %v1348 = vld [vmem:[%s1347] sm:$0xff]
      %v1349 = vld [vmem:[%s1347 + $0x8] sm:$0xff]
      %v1350 = vld [vmem:[%s1347 + $0x10] sm:$0xff]
      %v1351 = vld [vmem:[%s1347 + $0x18] sm:$0xff]
      %v1352 = vld [vmem:[%s1347 + $0x20] sm:$0xff]
      %v1353 = vld [vmem:[%s1347 + $0x28] sm:$0xff]
      %v1354 = vld [vmem:[%s1347 + $0x30] sm:$0xff]
      %v1355 = vld [vmem:[%s1347 + $0x38] sm:$0xff]
      %s1356 = scalar_lea.vmem %s3, 4
      %v1357 = vld [vmem:[%s1356] sm:$0x7]
      %vm1358 = vcmask 48128
      %v1360 = vsel %vm1358, %v1348, 0
      %v1363 = vsel %vm1358, %v1349, 0
      %v1366 = vsel %vm1358, %v1350, 0
      %v1369 = vsel %vm1358, %v1351, 0
      %v1372 = vsel %vm1358, %v1352, 0
      %v1375 = vsel %vm1358, %v1353, 0
      %v1378 = vsel %vm1358, %v1354, 0
      %v1381 = vsel %vm1358, %v1355, 0
      %vm1383 = vcmask 1042432
      %v1385 = vsel %vm1383, %v1357, 0
      %1387 = vmatprep.subr.bf16.mxu0 0
      %1388 = vmatpush1.bf16.msra.mxu0 %v1385
      %1389 = vmatprep.subr.bf16.mxu0 0
      %1390 = vmatpush1.bf16.msra.mxu0 0
      %1391 = vmatprep.subr.bf16.mxu0 0
      %1392 = vmatpush1.bf16.msra.mxu0 0
      %1393 = vmatprep.subr.bf16.mxu0 0
      %1394 = vmatpush1.bf16.msra.mxu0 0
      %1395 = vmatprep.subr.bf16.mxu0 0
      %1396 = vmatpush1.bf16.msra.mxu0 0
      %1397 = vmatprep.subr.bf16.mxu0 0
      %1398 = vmatpush1.bf16.msra.mxu0 0
      %1399 = vmatprep.subr.bf16.mxu0 0
      %1400 = vmatpush1.bf16.msra.mxu0 0
      %1401 = vmatprep.subr.bf16.mxu0 0
      %1402 = vmatpush1.bf16.msra.mxu0 0
      %1403 = vmatprep.subr.bf16.mxu0 0
      %1404 = vmatpush1.bf16.msra.mxu0 0
      %1405 = vmatprep.subr.bf16.mxu0 0
      %1406 = vmatpush1.bf16.msra.mxu0 0
      %1407 = vmatprep.subr.bf16.mxu0 0
      %1408 = vmatpush1.bf16.msra.mxu0 0
      %1409 = vmatprep.subr.bf16.mxu0 0
      %1410 = vmatpush1.bf16.msra.mxu0 0
      %1411 = vmatprep.subr.bf16.mxu0 0
      %1412 = vmatpush1.bf16.msra.mxu0 0
      %1413 = vmatprep.subr.bf16.mxu0 0
      %1414 = vmatpush1.bf16.msra.mxu0 0
      %1415 = vmatprep.subr.bf16.mxu0 0
      %1416 = vmatpush1.bf16.msra.mxu0 0
      %1417 = vmatprep.subr.bf16.mxu0 0
      %1418 = vmatpush1.bf16.msra.mxu0 0
      %1419 = vmatprep.mubr.bf16.mxu0 0
      %1420 = vmatmul.mubr.bf16.gmra.mrb[0].mxu0 %v1360
      %v1421 = vpop.f32.mrb[0].mxu0
      %v1422 = vadd.f32 0.0, %v1421
      %v1423 = vpop.f32.mrb[0].mxu0
      %v1424 = vpop.f32.mrb[0].mxu0
      %v1425 = vadd.f32 0.0, %v1424
      %v1426 = vpop.f32.mrb[0].mxu0
      %1427 = vmatprep.mubr.bf16.mxu0 0
      %1428 = vmatmul.mubr.bf16.gmra.mrb[0].mxu0 %v1363
      %v1429 = vpop.f32.mrb[0].mxu0
      %v1430 = vadd.f32 0.0, %v1429
      %v1431 = vpop.f32.mrb[0].mxu0
      %v1432 = vpop.f32.mrb[0].mxu0
      %v1433 = vadd.f32 0.0, %v1432
      %v1434 = vpop.f32.mrb[0].mxu0
      %1435 = vmatprep.mubr.bf16.mxu0 0
      %1436 = vmatmul.mubr.bf16.gmra.mrb[0].mxu0 %v1366
      %v1437 = vpop.f32.mrb[0].mxu0
      %v1438 = vadd.f32 0.0, %v1437
      %v1439 = vpop.f32.mrb[0].mxu0
      %v1440 = vpop.f32.mrb[0].mxu0
      %v1441 = vadd.f32 0.0, %v1440
      %v1442 = vpop.f32.mrb[0].mxu0
      %1443 = vmatprep.mubr.bf16.mxu0 0
      %1444 = vmatmul.mubr.bf16.gmra.mrb[0].mxu0 %v1369
      %v1445 = vpop.f32.mrb[0].mxu0
      %v1446 = vadd.f32 0.0, %v1445
      %v1447 = vpop.f32.mrb[0].mxu0
      %v1448 = vpop.f32.mrb[0].mxu0
      %v1449 = vadd.f32 0.0, %v1448
      %v1450 = vpop.f32.mrb[0].mxu0
      %1451 = vmatprep.mubr.bf16.mxu0 0
      %1452 = vmatmul.mubr.bf16.gmra.mrb[0].mxu0 %v1372
      %v1453 = vpop.f32.mrb[0].mxu0
      %v1454 = vadd.f32 0.0, %v1453
      %v1455 = vpop.f32.mrb[0].mxu0
      %v1456 = vpop.f32.mrb[0].mxu0
      %v1457 = vadd.f32 0.0, %v1456
      %v1458 = vpop.f32.mrb[0].mxu0
      %1459 = vmatprep.mubr.bf16.mxu0 0
      %1460 = vmatmul.mubr.bf16.gmra.mrb[0].mxu0 %v1375
      %v1461 = vpop.f32.mrb[0].mxu0
      %v1462 = vadd.f32 0.0, %v1461
      %v1463 = vpop.f32.mrb[0].mxu0
      %v1464 = vpop.f32.mrb[0].mxu0
      %v1465 = vadd.f32 0.0, %v1464
      %v1466 = vpop.f32.mrb[0].mxu0
      %1467 = vmatprep.mubr.bf16.mxu0 0
      %1468 = vmatmul.mubr.bf16.gmra.mrb[0].mxu0 %v1378
      %v1469 = vpop.f32.mrb[0].mxu0
      %v1470 = vadd.f32 0.0, %v1469
      %v1471 = vpop.f32.mrb[0].mxu0
      %v1472 = vpop.f32.mrb[0].mxu0
      %v1473 = vadd.f32 0.0, %v1472
      %v1474 = vpop.f32.mrb[0].mxu0
      %1475 = vmatprep.mubr.bf16.mxu0 0
      %1476 = vmatmul.mubr.bf16.gmra.mrb[0].mxu0 %v1381
      %v1477 = vpop.f32.mrb[0].mxu0
      %v1478 = vadd.f32 0.0, %v1477
      %v1479 = vpop.f32.mrb[0].mxu0
      %v1480 = vpop.f32.mrb[0].mxu0
      %v1481 = vadd.f32 0.0, %v1480
      %v1482 = vpop.f32.mrb[0].mxu0
      %1483 = vdwg.mxu0
      %v1485 = vsel %vm1358, %v1336, 0
      %v1488 = vsel %vm1358, %v1337, 0
      %v1491 = vsel %vm1358, %v1338, 0
      %v1494 = vsel %vm1358, %v1339, 0
      %v1497 = vsel %vm1358, %v1340, 0
      %v1500 = vsel %vm1358, %v1341, 0
      %v1503 = vsel %vm1358, %v1342, 0
      %v1506 = vsel %vm1358, %v1343, 0
      %v1509 = vsel %vm1383, %v1344, 0
      %1511 = vmatprep.subr.bf16.mxu0 0
      %1512 = vmatpush1.bf16.msra.mxu0 %v1509
      %1513 = vmatprep.subr.bf16.mxu0 0
      %1514 = vmatpush1.bf16.msra.mxu0 0
      %1515 = vmatprep.subr.bf16.mxu0 0
      %1516 = vmatpush1.bf16.msra.mxu0 0
      %1517 = vmatprep.subr.bf16.mxu0 0
      %1518 = vmatpush1.bf16.msra.mxu0 0
      %1519 = vmatprep.subr.bf16.mxu0 0
      %1520 = vmatpush1.bf16.msra.mxu0 0
      %1521 = vmatprep.subr.bf16.mxu0 0
      %1522 = vmatpush1.bf16.msra.mxu0 0
      %1523 = vmatprep.subr.bf16.mxu0 0
      %1524 = vmatpush1.bf16.msra.mxu0 0
      %1525 = vmatprep.subr.bf16.mxu0 0
      %1526 = vmatpush1.bf16.msra.mxu0 0
      %1527 = vmatprep.subr.bf16.mxu0 0
      %1528 = vmatpush1.bf16.msra.mxu0 0
      %1529 = vmatprep.subr.bf16.mxu0 0
      %1530 = vmatpush1.bf16.msra.mxu0 0
      %1531 = vmatprep.subr.bf16.mxu0 0
      %1532 = vmatpush1.bf16.msra.mxu0 0
      %1533 = vmatprep.subr.bf16.mxu0 0
      %1534 = vmatpush1.bf16.msra.mxu0 0
      %1535 = vmatprep.subr.bf16.mxu0 0
      %1536 = vmatpush1.bf16.msra.mxu0 0
      %1537 = vmatprep.subr.bf16.mxu0 0
      %1538 = vmatpush1.bf16.msra.mxu0 0
      %1539 = vmatprep.subr.bf16.mxu0 0
      %1540 = vmatpush1.bf16.msra.mxu0 0
      %1541 = vmatprep.subr.bf16.mxu0 0
      %1542 = vmatpush1.bf16.msra.mxu0 0
      %1543 = vmatprep.mubr.bf16.mxu0 0
      %1544 = vmatmul.mubr.bf16.gmra.mrb[0].mxu0 %v1485
      %v1545 = vpop.f32.mrb[0].mxu0
      %v1546 = vadd.f32 %v1422, %v1545
      %v1547 = vpop.f32.mrb[0].mxu0
      %v1548 = vpop.f32.mrb[0].mxu0
      %v1549 = vadd.f32 %v1425, %v1548
      %v1550 = vpop.f32.mrb[0].mxu0
      %1551 = vmatprep.mubr.bf16.mxu0 0
      %1552 = vmatmul.mubr.bf16.gmra.mrb[0].mxu0 %v1488
      %v1553 = vpop.f32.mrb[0].mxu0
      %v1554 = vadd.f32 %v1430, %v1553
      %v1555 = vpop.f32.mrb[0].mxu0
      %v1556 = vpop.f32.mrb[0].mxu0
      %v1557 = vadd.f32 %v1433, %v1556
      %v1558 = vpop.f32.mrb[0].mxu0
      %1559 = vmatprep.mubr.bf16.mxu0 0
      %1560 = vmatmul.mubr.bf16.gmra.mrb[0].mxu0 %v1491
      %v1561 = vpop.f32.mrb[0].mxu0
      %v1562 = vadd.f32 %v1438, %v1561
      %v1563 = vpop.f32.mrb[0].mxu0
      %v1564 = vpop.f32.mrb[0].mxu0
      %v1565 = vadd.f32 %v1441, %v1564
      %v1566 = vpop.f32.mrb[0].mxu0
      %1567 = vmatprep.mubr.bf16.mxu0 0
      %1568 = vmatmul.mubr.bf16.gmra.mrb[0].mxu0 %v1494
      %v1569 = vpop.f32.mrb[0].mxu0
      %v1570 = vadd.f32 %v1446, %v1569
      %v1571 = vpop.f32.mrb[0].mxu0
      %v1572 = vpop.f32.mrb[0].mxu0
      %v1573 = vadd.f32 %v1449, %v1572
      %v1574 = vpop.f32.mrb[0].mxu0
      %1575 = vmatprep.mubr.bf16.mxu0 0
      %1576 = vmatmul.mubr.bf16.gmra.mrb[0].mxu0 %v1497
      %v1577 = vpop.f32.mrb[0].mxu0
      %v1578 = vadd.f32 %v1454, %v1577
      %v1579 = vpop.f32.mrb[0].mxu0
      %v1580 = vpop.f32.mrb[0].mxu0
      %v1581 = vadd.f32 %v1457, %v1580
      %v1582 = vpop.f32.mrb[0].mxu0
      %1583 = vmatprep.mubr.bf16.mxu0 0
      %1584 = vmatmul.mubr.bf16.gmra.mrb[0].mxu0 %v1500
      %v1585 = vpop.f32.mrb[0].mxu0
      %v1586 = vadd.f32 %v1462, %v1585
      %v1587 = vpop.f32.mrb[0].mxu0
      %v1588 = vpop.f32.mrb[0].mxu0
      %v1589 = vadd.f32 %v1465, %v1588
      %v1590 = vpop.f32.mrb[0].mxu0
      %1591 = vmatprep.mubr.bf16.mxu0 0
      %1592 = vmatmul.mubr.bf16.gmra.mrb[0].mxu0 %v1503
      %v1593 = vpop.f32.mrb[0].mxu0
      %v1594 = vadd.f32 %v1470, %v1593
      %v1595 = vpop.f32.mrb[0].mxu0
      %v1596 = vpop.f32.mrb[0].mxu0
      %v1597 = vadd.f32 %v1473, %v1596
      %v1598 = vpop.f32.mrb[0].mxu0
      %1599 = vmatprep.mubr.bf16.mxu0 0
      %1600 = vmatmul.mubr.bf16.gmra.mrb[0].mxu0 %v1506
      %v1601 = vpop.f32.mrb[0].mxu0
      %v1602 = vadd.f32 %v1478, %v1601
      %v1603 = vpop.f32.mrb[0].mxu0
      %v1604 = vpop.f32.mrb[0].mxu0
      %v1605 = vadd.f32 %v1481, %v1604
      %v1606 = vpop.f32.mrb[0].mxu0
      %1607 = vdwg.mxu0
      %s1608 = sadd.s32 %s1333, 2
      %s1609 = smul.addr %s1608, 8
      %s1610 = scalar_lea.vmem [#allocation2], %s1609
      %v1611 = vld [vmem:[%s1610] sm:$0xff]
      %v1612 = vld [vmem:[%s1610 + $0x8] sm:$0xff]
      %v1613 = vld [vmem:[%s1610 + $0x10] sm:$0xff]
      %v1614 = vld [vmem:[%s1610 + $0x18] sm:$0xff]
      %v1615 = vld [vmem:[%s1610 + $0x20] sm:$0xff]
      %v1616 = vld [vmem:[%s1610 + $0x28] sm:$0xff]
      %v1617 = vld [vmem:[%s1610 + $0x30] sm:$0xff]
      %v1618 = vld [vmem:[%s1610 + $0x38] sm:$0xff]
      %s1619 = scalar_lea.vmem %s3, 8
      %v1620 = vld [vmem:[%s1619] sm:$0x7]
      %v1622 = vsel %vm1358, %v1611, 0
      %v1625 = vsel %vm1358, %v1612, 0
      %v1628 = vsel %vm1358, %v1613, 0
      %v1631 = vsel %vm1358, %v1614, 0
      %v1634 = vsel %vm1358, %v1615, 0
      %v1637 = vsel %vm1358, %v1616, 0
      %v1640 = vsel %vm1358, %v1617, 0
      %v1643 = vsel %vm1358, %v1618, 0
      %v1646 = vsel %vm1383, %v1620, 0
      %1648 = vmatprep.subr.bf16.mxu0 0
      %1649 = vmatpush1.bf16.msra.mxu0 %v1646
      %1650 = vmatprep.subr.bf16.mxu0 0
      %1651 = vmatpush1.bf16.msra.mxu0 0
      %1652 = vmatprep.subr.bf16.mxu0 0
      %1653 = vmatpush1.bf16.msra.mxu0 0
      %1654 = vmatprep.subr.bf16.mxu0 0
      %1655 = vmatpush1.bf16.msra.mxu0 0
      %1656 = vmatprep.subr.bf16.mxu0 0
      %1657 = vmatpush1.bf16.msra.mxu0 0
      %1658 = vmatprep.subr.bf16.mxu0 0
      %1659 = vmatpush1.bf16.msra.mxu0 0
      %1660 = vmatprep.subr.bf16.mxu0 0
      %1661 = vmatpush1.bf16.msra.mxu0 0
      %1662 = vmatprep.subr.bf16.mxu0 0
      %1663 = vmatpush1.bf16.msra.mxu0 0
      %1664 = vmatprep.subr.bf16.mxu0 0
      %1665 = vmatpush1.bf16.msra.mxu0 0
      %1666 = vmatprep.subr.bf16.mxu0 0
      %1667 = vmatpush1.bf16.msra.mxu0 0
      %1668 = vmatprep.subr.bf16.mxu0 0
      %1669 = vmatpush1.bf16.msra.mxu0 0
      %1670 = vmatprep.subr.bf16.mxu0 0
      %1671 = vmatpush1.bf16.msra.mxu0 0
      %1672 = vmatprep.subr.bf16.mxu0 0
      %1673 = vmatpush1.bf16.msra.mxu0 0
      %1674 = vmatprep.subr.bf16.mxu0 0
      %1675 = vmatpush1.bf16.msra.mxu0 0
      %1676 = vmatprep.subr.bf16.mxu0 0
      %1677 = vmatpush1.bf16.msra.mxu0 0
      %1678 = vmatprep.subr.bf16.mxu0 0
      %1679 = vmatpush1.bf16.msra.mxu0 0
      %1680 = vmatprep.mubr.bf16.mxu0 0
      %1681 = vmatmul.mubr.bf16.gmra.mrb[0].mxu0 %v1622
      %v1682 = vpop.f32.mrb[0].mxu0
      %v1683 = vadd.f32 0.0, %v1682
      %v1684 = vpop.f32.mrb[0].mxu0
      %v1685 = vpop.f32.mrb[0].mxu0
      %v1686 = vadd.f32 0.0, %v1685
      %v1687 = vpop.f32.mrb[0].mxu0
      %1688 = vmatprep.mubr.bf16.mxu0 0
      %1689 = vmatmul.mubr.bf16.gmra.mrb[0].mxu0 %v1625
      %v1690 = vpop.f32.mrb[0].mxu0
      %v1691 = vadd.f32 0.0, %v1690
      %v1692 = vpop.f32.mrb[0].mxu0
      %v1693 = vpop.f32.mrb[0].mxu0
      %v1694 = vadd.f32 0.0, %v1693
      %v1695 = vpop.f32.mrb[0].mxu0
      %1696 = vmatprep.mubr.bf16.mxu0 0
      %1697 = vmatmul.mubr.bf16.gmra.mrb[0].mxu0 %v1628
      %v1698 = vpop.f32.mrb[0].mxu0
      %v1699 = vadd.f32 0.0, %v1698
      %v1700 = vpop.f32.mrb[0].mxu0
      %v1701 = vpop.f32.mrb[0].mxu0
      %v1702 = vadd.f32 0.0, %v1701
      %v1703 = vpop.f32.mrb[0].mxu0
      %1704 = vmatprep.mubr.bf16.mxu0 0
      %1705 = vmatmul.mubr.bf16.gmra.mrb[0].mxu0 %v1631
      %v1706 = vpop.f32.mrb[0].mxu0
      %v1707 = vadd.f32 0.0, %v1706
      %v1708 = vpop.f32.mrb[0].mxu0
      %v1709 = vpop.f32.mrb[0].mxu0
      %v1710 = vadd.f32 0.0, %v1709
      %v1711 = vpop.f32.mrb[0].mxu0
      %1712 = vmatprep.mubr.bf16.mxu0 0
      %1713 = vmatmul.mubr.bf16.gmra.mrb[0].mxu0 %v1634
      %v1714 = vpop.f32.mrb[0].mxu0
      %v1715 = vadd.f32 0.0, %v1714
      %v1716 = vpop.f32.mrb[0].mxu0
      %v1717 = vpop.f32.mrb[0].mxu0
      %v1718 = vadd.f32 0.0, %v1717
      %v1719 = vpop.f32.mrb[0].mxu0
      %1720 = vmatprep.mubr.bf16.mxu0 0
      %1721 = vmatmul.mubr.bf16.gmra.mrb[0].mxu0 %v1637
      %v1722 = vpop.f32.mrb[0].mxu0
      %v1723 = vadd.f32 0.0, %v1722
      %v1724 = vpop.f32.mrb[0].mxu0
      %v1725 = vpop.f32.mrb[0].mxu0
      %v1726 = vadd.f32 0.0, %v1725
      %v1727 = vpop.f32.mrb[0].mxu0
      %1728 = vmatprep.mubr.bf16.mxu0 0
      %1729 = vmatmul.mubr.bf16.gmra.mrb[0].mxu0 %v1640
      %v1730 = vpop.f32.mrb[0].mxu0
      %v1731 = vadd.f32 0.0, %v1730
      %v1732 = vpop.f32.mrb[0].mxu0
      %v1733 = vpop.f32.mrb[0].mxu0
      %v1734 = vadd.f32 0.0, %v1733
      %v1735 = vpop.f32.mrb[0].mxu0
      %1736 = vmatprep.mubr.bf16.mxu0 0
      %1737 = vmatmul.mubr.bf16.gmra.mrb[0].mxu0 %v1643
      %v1738 = vpop.f32.mrb[0].mxu0
      %v1739 = vadd.f32 0.0, %v1738
      %v1740 = vpop.f32.mrb[0].mxu0
      %v1741 = vpop.f32.mrb[0].mxu0
      %v1742 = vadd.f32 0.0, %v1741
      %v1743 = vpop.f32.mrb[0].mxu0
      %1744 = vdwg.mxu0
      %v1745 = vadd.f32 %v1546, %v1683
      %v1746 = vadd.f32 %v1549, %v1686
      %v1747 = vadd.f32 %v1554, %v1691
      %v1748 = vadd.f32 %v1557, %v1694
      %v1749 = vadd.f32 %v1562, %v1699
      %v1750 = vadd.f32 %v1565, %v1702
      %v1751 = vadd.f32 %v1570, %v1707
      %v1752 = vadd.f32 %v1573, %v1710
      %v1753 = vadd.f32 %v1578, %v1715
      %v1754 = vadd.f32 %v1581, %v1718
      %v1755 = vadd.f32 %v1586, %v1723
      %v1756 = vadd.f32 %v1589, %v1726
      %v1757 = vadd.f32 %v1594, %v1731
      %v1758 = vadd.f32 %v1597, %v1734
      %v1759 = vadd.f32 %v1602, %v1739
      %v1760 = vadd.f32 %v1605, %v1742
      %v1761 = vld [vmem:[%s4] sm:$0x1]
      %v1763 = vlaneseq
      %v1764 = vshrl.u32 %v1763, 7
      %v1765 = vsub.s32 0, %v1764
      %v1766 = vrot.slane %v1761, %v1765
      %v1768 = vadd.f32 %v1745, %v1766
      %v1769 = vadd.f32 %v1746, %v1766
      %v1770 = vadd.f32 %v1747, %v1766
      %v1771 = vadd.f32 %v1748, %v1766
      %v1772 = vadd.f32 %v1749, %v1766
      %v1773 = vadd.f32 %v1750, %v1766
      %v1774 = vadd.f32 %v1751, %v1766
      %v1775 = vadd.f32 %v1752, %v1766
      %v1776 = vadd.f32 %v1753, %v1766
      %v1777 = vadd.f32 %v1754, %v1766
      %v1778 = vadd.f32 %v1755, %v1766
      %v1779 = vadd.f32 %v1756, %v1766
      %v1780 = vadd.f32 %v1757, %v1766
      %v1781 = vadd.f32 %v1758, %v1766
      %v1782 = vadd.f32 %v1759, %v1766
      %v1783 = vadd.f32 %v1760, %v1766
      %v1784 = vxor.u32 %v1768, 2147483648
      %v1785 = vxor.u32 %v1769, 2147483648
      %v1786 = vxor.u32 %v1770, 2147483648
      %v1787 = vxor.u32 %v1771, 2147483648
      %v1788 = vxor.u32 %v1772, 2147483648
      %v1789 = vxor.u32 %v1773, 2147483648
      %v1790 = vxor.u32 %v1774, 2147483648
      %v1791 = vxor.u32 %v1775, 2147483648
      %v1792 = vxor.u32 %v1776, 2147483648
      %v1793 = vxor.u32 %v1777, 2147483648
      %v1794 = vxor.u32 %v1778, 2147483648
      %v1795 = vxor.u32 %v1779, 2147483648
      %v1796 = vxor.u32 %v1780, 2147483648
      %v1797 = vxor.u32 %v1781, 2147483648
      %v1798 = vxor.u32 %v1782, 2147483648
      %v1799 = vxor.u32 %v1783, 2147483648
      %v1800 = vmul.f32 %v1784, 1.442695
      %v1801 = vpow.pop %v1800
      %v1802 = vmul.f32 %v1785, 1.442695
      %v1803 = vpow.pop %v1802
      %v1804 = vmul.f32 %v1786, 1.442695
      %v1805 = vpow.pop %v1804
      %v1806 = vmul.f32 %v1787, 1.442695
      %v1807 = vpow.pop %v1806
      %v1808 = vmul.f32 %v1788, 1.442695
      %v1809 = vpow.pop %v1808
      %v1810 = vmul.f32 %v1789, 1.442695
      %v1811 = vpow.pop %v1810
      %v1812 = vmul.f32 %v1790, 1.442695
      %v1813 = vpow.pop %v1812
      %v1814 = vmul.f32 %v1791, 1.442695
      %v1815 = vpow.pop %v1814
      %v1816 = vmul.f32 %v1792, 1.442695
      %v1817 = vpow.pop %v1816
      %v1818 = vmul.f32 %v1793, 1.442695
      %v1819 = vpow.pop %v1818
      %v1820 = vmul.f32 %v1794, 1.442695
      %v1821 = vpow.pop %v1820
      %v1822 = vmul.f32 %v1795, 1.442695
      %v1823 = vpow.pop %v1822
      %v1824 = vmul.f32 %v1796, 1.442695
      %v1825 = vpow.pop %v1824
      %v1826 = vmul.f32 %v1797, 1.442695
      %v1827 = vpow.pop %v1826
      %v1828 = vmul.f32 %v1798, 1.442695
      %v1829 = vpow.pop %v1828
      %v1830 = vmul.f32 %v1799, 1.442695
      %v1831 = vpow.pop %v1830
      %v1832 = vadd.f32 %v1801, 1.0
      %v1833 = vadd.f32 %v1803, 1.0
      %v1834 = vadd.f32 %v1805, 1.0
      %v1835 = vadd.f32 %v1807, 1.0
      %v1836 = vadd.f32 %v1809, 1.0
      %v1837 = vadd.f32 %v1811, 1.0
      %v1838 = vadd.f32 %v1813, 1.0
      %v1839 = vadd.f32 %v1815, 1.0
      %v1840 = vadd.f32 %v1817, 1.0
      %v1841 = vadd.f32 %v1819, 1.0
      %v1842 = vadd.f32 %v1821, 1.0
      %v1843 = vadd.f32 %v1823, 1.0
      %v1844 = vadd.f32 %v1825, 1.0
      %v1845 = vadd.f32 %v1827, 1.0
      %v1846 = vadd.f32 %v1829, 1.0
      %v1847 = vadd.f32 %v1831, 1.0
      %v1848 = vrcp.pop %v1832
      %v1849 = vmul.f32 1.0, %v1848
      %v1850 = vrcp.pop %v1833
      %v1851 = vmul.f32 1.0, %v1850
      %v1852 = vrcp.pop %v1834
      %v1853 = vmul.f32 1.0, %v1852
      %v1854 = vrcp.pop %v1835
      %v1855 = vmul.f32 1.0, %v1854
      %v1856 = vrcp.pop %v1836
      %v1857 = vmul.f32 1.0, %v1856
      %v1858 = vrcp.pop %v1837
      %v1859 = vmul.f32 1.0, %v1858
      %v1860 = vrcp.pop %v1838
      %v1861 = vmul.f32 1.0, %v1860
      %v1862 = vrcp.pop %v1839
      %v1863 = vmul.f32 1.0, %v1862
      %v1864 = vrcp.pop %v1840
      %v1865 = vmul.f32 1.0, %v1864
      %v1866 = vrcp.pop %v1841
      %v1867 = vmul.f32 1.0, %v1866
      %v1868 = vrcp.pop %v1842
      %v1869 = vmul.f32 1.0, %v1868
      %v1870 = vrcp.pop %v1843
      %v1871 = vmul.f32 1.0, %v1870
      %v1872 = vrcp.pop %v1844
      %v1873 = vmul.f32 1.0, %v1872
      %v1874 = vrcp.pop %v1845
      %v1875 = vmul.f32 1.0, %v1874
      %v1876 = vrcp.pop %v1846
      %v1877 = vmul.f32 1.0, %v1876
      %v1878 = vrcp.pop %v1847
      %v1879 = vmul.f32 1.0, %v1878
      %v1880 = vmul.f32 %v1768, %v1849
      %v1881 = vmul.f32 %v1769, %v1851
      %v1882 = vmul.f32 %v1770, %v1853
      %v1883 = vmul.f32 %v1771, %v1855
      %v1884 = vmul.f32 %v1772, %v1857
      %v1885 = vmul.f32 %v1773, %v1859
      %v1886 = vmul.f32 %v1774, %v1861
      %v1887 = vmul.f32 %v1775, %v1863
      %v1888 = vmul.f32 %v1776, %v1865
      %v1889 = vmul.f32 %v1777, %v1867
      %v1890 = vmul.f32 %v1778, %v1869
      %v1891 = vmul.f32 %v1779, %v1871
      %v1892 = vmul.f32 %v1780, %v1873
      %v1893 = vmul.f32 %v1781, %v1875
      %v1894 = vmul.f32 %v1782, %v1877
      %v1895 = vmul.f32 %v1783, %v1879
      %s1896 = smul.u32 %s1333, 2
      %s1897 = smul.addr %s1896, 4
      %s1898 = scalar_lea.vmem %s238, %s1897
      %v1899 = vld [vmem:[%s1898] sm:$0xf]
      %v1900 = vld [vmem:[%s1898 + $0x4] sm:$0xf]
      %v1901 = vld [vmem:[%s1898 + $0x8] sm:$0xf]
      %v1902 = vld [vmem:[%s1898 + $0xc] sm:$0xf]
      %v1903 = vld [vmem:[%s1898 + $0x10] sm:$0xf]
      %v1904 = vld [vmem:[%s1898 + $0x14] sm:$0xf]
      %v1905 = vld [vmem:[%s1898 + $0x18] sm:$0xf]
      %v1906 = vld [vmem:[%s1898 + $0x1c] sm:$0xf]
      %v1907 = vld [vmem:[%s1898 + $0x20] sm:$0xf]
      %v1908 = vld [vmem:[%s1898 + $0x24] sm:$0xf]
      %v1909 = vld [vmem:[%s1898 + $0x28] sm:$0xf]
      %v1910 = vld [vmem:[%s1898 + $0x2c] sm:$0xf]
      %v1911 = vld [vmem:[%s1898 + $0x30] sm:$0xf]
      %v1912 = vld [vmem:[%s1898 + $0x34] sm:$0xf]
      %v1913 = vld [vmem:[%s1898 + $0x38] sm:$0xf]
      %v1914 = vld [vmem:[%s1898 + $0x3c] sm:$0xf]
      %v1915 = vunpack.c.l.bf16 %v1899
      %v1916 = vunpack.c.l.bf16 %v1900
      %v1917 = vunpack.c.l.bf16 %v1901
      %v1918 = vunpack.c.l.bf16 %v1902
      %v1919 = vunpack.c.l.bf16 %v1903
      %v1920 = vunpack.c.l.bf16 %v1904
      %v1921 = vunpack.c.l.bf16 %v1905
      %v1922 = vunpack.c.l.bf16 %v1906
      %v1923 = vunpack.c.l.bf16 %v1907
      %v1924 = vunpack.c.l.bf16 %v1908
      %v1925 = vunpack.c.l.bf16 %v1909
      %v1926 = vunpack.c.l.bf16 %v1910
      %v1927 = vunpack.c.l.bf16 %v1911
      %v1928 = vunpack.c.l.bf16 %v1912
      %v1929 = vunpack.c.l.bf16 %v1913
      %v1930 = vunpack.c.l.bf16 %v1914
      %v1931 = vadd.f32 %v1880, %v1915
      %v1932 = vadd.f32 %v1881, %v1916
      %v1933 = vadd.f32 %v1882, %v1917
      %v1934 = vadd.f32 %v1883, %v1918
      %v1935 = vadd.f32 %v1884, %v1919
      %v1936 = vadd.f32 %v1885, %v1920
      %v1937 = vadd.f32 %v1886, %v1921
      %v1938 = vadd.f32 %v1887, %v1922
      %v1939 = vadd.f32 %v1888, %v1923
      %v1940 = vadd.f32 %v1889, %v1924
      %v1941 = vadd.f32 %v1890, %v1925
      %v1942 = vadd.f32 %v1891, %v1926
      %v1943 = vadd.f32 %v1892, %v1927
      %v1944 = vadd.f32 %v1893, %v1928
      %v1945 = vadd.f32 %v1894, %v1929
      %v1946 = vadd.f32 %v1895, %v1930
      %vm1947 = vcmask 31744
      %1948 = vst.msk [vmem:[%s248] sm:$0xff] %vm1947, %v1931
      %1949 = vst.msk [vmem:[%s248 + $0x8] sm:$0xff] %vm1947, %v1932
      %1950 = vst.msk [vmem:[%s248 + $0x10] sm:$0xff] %vm1947, %v1933
      %1951 = vst.msk [vmem:[%s248 + $0x18] sm:$0xff] %vm1947, %v1934
      %1952 = vst.msk [vmem:[%s248 + $0x20] sm:$0xff] %vm1947, %v1935
      %1953 = vst.msk [vmem:[%s248 + $0x28] sm:$0xff] %vm1947, %v1936
      %1954 = vst.msk [vmem:[%s248 + $0x30] sm:$0xff] %vm1947, %v1937
      %1955 = vst.msk [vmem:[%s248 + $0x38] sm:$0xff] %vm1947, %v1938
      %1956 = vst.msk [vmem:[%s248 + $0x40] sm:$0xff] %vm1947, %v1939
      %1957 = vst.msk [vmem:[%s248 + $0x48] sm:$0xff] %vm1947, %v1940
      %1958 = vst.msk [vmem:[%s248 + $0x50] sm:$0xff] %vm1947, %v1941
      %1959 = vst.msk [vmem:[%s248 + $0x58] sm:$0xff] %vm1947, %v1942
      %1960 = vst.msk [vmem:[%s248 + $0x60] sm:$0xff] %vm1947, %v1943
      %1961 = vst.msk [vmem:[%s248 + $0x68] sm:$0xff] %vm1947, %v1944
      %1962 = vst.msk [vmem:[%s248 + $0x70] sm:$0xff] %vm1947, %v1945
      %1963 = vst.msk [vmem:[%s248 + $0x78] sm:$0xff] %vm1947, %v1946
      %s1964 = smul.u32 8, %s21
      %p1965 = scmp.lt.s32.totalorder %s20, 1
      %s1966 = scalar_select %p1965, %s20, 1
      %p1967 = scmp.lt.s32.totalorder %s1964, 15
      %s1968 = scalar_select %p1967, %s1964, 15
      %s1969 = smul.addr %s1968, 2
      %s1970 = smul.addr %s1966, 32
      %s1971 = sadd.s32 %s1969, %s1970
      %s1972 = smul.addr %s1971, 8
      %s1973 = scalar_lea.vmem %s5, %s1972
      // Predicated region
      $region45: #{tpu_custom_call.1} parent=39 // pred_check
        %p1974 = pneg %p158
      $region46: #{tpu_custom_call.1} parent=39 // pred_check_branch
        %1976 = sbr.rel (%p1974) target = $region48
      $region47: #{tpu_custom_call.1} parent=39 // pred_region
        %s1977 = smul.u32 8, %s21
      $region48: #{tpu_custom_call.1} parent=39 // pred_fallthru
        _
    $region40: #{tpu_custom_call.1} parent=5 // pred_fallthru
      _
    %p1978 = scmp.le.s32.totalorder 2, %s11
    // Predicated region
    $region49: #{tpu_custom_call.1} parent=5 // pred_check
      %p1979 = pneg %p1978
    $region50: #{tpu_custom_call.1} parent=5 // pred_check_branch
      %1981 = sbr.rel (%p1979) target = $region52
    $region51: #{tpu_custom_call.1} parent=5 // pred_region
      %s1982 = ssub.s32 %s11, 2
      // Predicated region
      $region53: #{tpu_custom_call.1} parent=51 // pred_check
        %p1983 = pneg %p164
      $region54: #{tpu_custom_call.1} parent=51 // pred_check_branch
        %1985 = sbr.rel (%p1983) target = $region56
      $region55: #{tpu_custom_call.1} parent=51 // pred_region
        %s1986 = smul.u32 8, %s23
        %p1987 = scmp.lt.s32.totalorder %s22, 1
        %s1988 = scalar_select %p1987, %s22, 1
        %p1989 = scmp.lt.s32.totalorder %s1986, 15
        %s1990 = scalar_select %p1989, %s1986, 15
        %s1991 = smul.addr %s1990, 2
        %s1992 = smul.addr %s1988, 32
        %s1993 = sadd.s32 %s1991, %s1992
        %s1994 = smul.addr %s1993, 8
        %s1995 = scalar_lea.vmem %s5, %s1994
      $region56: #{tpu_custom_call.1} parent=51 // pred_fallthru
        _
    $region52: #{tpu_custom_call.1} parent=5 // pred_fallthru
      _
  $region6: #{tpu_custom_call.1} parent=0 // loop_footer
    %s15 = sadd.s32 1, %s11
  $region7: #{tpu_custom_call.1} parent=0 // loop_footer_branch
    %10 = sbr.rel target = $region3
  $region8: #{tpu_custom_call.1} parent=0 // loop_exit
    _

</llo_original>
